<compile_context>
chip_gen: v5e
topology: v5e:2x2
jax: 0.10.0
libtpu: 0.0.40
codegen_flags: <defaults>
</compile_context>

<pallas_src>
import math
import functools

import numpy as np
import jax
import jax.numpy as jnp
from jax.experimental import pallas as pl


# -----------------------------------------------------------------------------
# Fused Pallas kernel
# -----------------------------------------------------------------------------
def _began_generator_kernel(*refs, B, n, channel, blocks):
    nl = 2 * blocks + 1                      # number of conv layers
    z_ref, fcw_ref, fcb_ref, rowdup_ref, smask_ref, sumblk_ref = refs[:6]
    pos = 6
    conv_w, conv_b = [], []
    for _ in range(nl):
        conv_w.append(refs[pos]); conv_b.append(refs[pos + 1]); pos += 2
    sizes = [8 * (2 ** i) for i in range(blocks)]
    shift = {}
    for s in sizes:
        shift[s] = (refs[pos], refs[pos + 1]); pos += 2       # (sup, sdn)
    ups = []
    for _ in range(blocks - 1):
        ups.append((refs[pos], refs[pos + 1])); pos += 2      # (D, E)
    o_ref = refs[pos]

    f32 = jnp.float32

    # ---- fully connected layer -------------------------------------------
    fcout = jnp.dot(z_ref[...], fcw_ref[...],
                    preferred_element_type=f32) + fcb_ref[...]      # (B, 64n)

    # ---- spread (B, 64n) -> lane-packed (8B, 8n): rows=(y,b), lanes=(x*n+c)
    frep = jnp.dot(rowdup_ref[...], fcout, preferred_element_type=f32)  # (8B, 64n)
    frep = frep * smask_ref[...]                                        # keep own y-block
    x = jnp.dot(frep, sumblk_ref[...], preferred_element_type=f32)      # (8B, 8n)

    # ---- one 3x3 SAME conv (x-taps folded in weight, y-taps via shift mats)
    def conv(xv, w_ref, b_ref, sup_ref, sdn_ref, W, Co, apply_elu):
        N = W * Co
        prod = jnp.dot(xv, w_ref[...], preferred_element_type=f32)   # (R, 3N)
        p0 = prod[:, 0:N]          # kernel row d=0  (source y-1)
        p1 = prod[:, N:2 * N]      # kernel row d=1  (source y)
        p2 = prod[:, 2 * N:3 * N]  # kernel row d=2  (source y+1)
        acc = (jnp.dot(sdn_ref[...], p0, preferred_element_type=f32)
               + p1
               + jnp.dot(sup_ref[...], p2, preferred_element_type=f32)
               + b_ref[...])
        if apply_elu:
            # ELU(alpha=1): x if x > 0 else exp(x) - 1   (overflow safe)
            acc = jnp.where(acc > 0, acc,
                            jnp.exp(jnp.minimum(acc, 0.0)) - 1.0)
        return acc

    W = 8
    li = 0
    for i in range(blocks):
        sup, sdn = shift[W]
        x = conv(x, conv_w[li], conv_b[li], sup, sdn, W, n, True); li += 1
        x = conv(x, conv_w[li], conv_b[li], sup, sdn, W, n, True); li += 1
        if i < blocks - 1:
            D_ref, E_ref = ups[i]
            # nearest-neighbour 2x upsample: lane duplication then row duplication
            x = jnp.dot(x, E_ref[...], preferred_element_type=f32)     # (R, 2*W*n)
            x = jnp.dot(D_ref[...], x, preferred_element_type=f32)     # (2R, 2*W*n)
            W *= 2
    sup, sdn = shift[W]
    x = conv(x, conv_w[li], conv_b[li], sup, sdn, W, channel, False)

    o_ref[...] = x.astype(o_ref.dtype)                                 # (W*B, W*channel)


# -----------------------------------------------------------------------------
# Host-side parameter packing (pure index bookkeeping, done once, outside kernel)
# -----------------------------------------------------------------------------
def pack_params(params, *, B, n, channel, blocks):
    nl = 2 * blocks + 1
    sizes = [8 * (2 ** i) for i in range(blocks)]
    spatial = 8 * 8
    packed = {}

    # fc: permute columns from PyTorch .view(-1, n, 8, 8) order (c, y, x)
    # to the kernel's (y, x, c) lane order.
    fcw = np.asarray(params["fc_w"], dtype=np.float32)     # (h, 64n)
    fcb = np.asarray(params["fc_b"], dtype=np.float32)     # (64n,)
    perm = np.empty(spatial * n, dtype=np.int64)
    for y in range(8):
        for xx in range(8):
            for c in range(n):
                perm[(y * 8 + xx) * n + c] = c * spatial + y * 8 + xx
    packed["fc_w"] = jnp.asarray(fcw[:, perm])
    packed["fc_b"] = jnp.asarray(fcb[perm][None, :])

    # spread helpers: (B, 64n) -> (8B, 8n)
    R0 = 8 * B
    rowdup = np.zeros((R0, B), np.float32)
    for y in range(8):
        for bb in range(B):
            rowdup[y * B + bb, bb] = 1.0
    smask = np.zeros((R0, spatial * n), np.float32)
    for r in range(R0):
        y = r // B
        smask[r, y * 8 * n:(y + 1) * 8 * n] = 1.0
    sumblk = np.zeros((spatial * n, 8 * n), np.float32)
    for j in range(spatial * n):
        sumblk[j, j % (8 * n)] = 1.0
    packed["rowdup"] = jnp.asarray(rowdup)
    packed["smask"] = jnp.asarray(smask)
    packed["sumblk"] = jnp.asarray(sumblk)

    # per-conv-layer spatial widths
    widths = []
    W = 8
    for i in range(blocks):
        widths += [W, W]
        if i < blocks - 1:
            W *= 2
    widths.append(W)

    # conv weights: fold the x-taps (and x zero-padding) into a
    # (W*Cin, 3*W*Cout) matrix; biases tiled along lanes.
    packed["conv"] = []
    for li in range(nl):
        w = np.asarray(params[f"conv{li}_w"], dtype=np.float32)   # (3,3,Ci,Co) HWIO
        bvec = np.asarray(params[f"conv{li}_b"], dtype=np.float32)
        Ws = widths[li]
        Ci, Co = w.shape[2], w.shape[3]
        wmat = np.zeros((Ws * Ci, 3 * Ws * Co), np.float32)
        for d in range(3):
            for kx in range(3):
                for xx in range(Ws):
                    xs = xx + kx - 1
                    if 0 <= xs < Ws:
                        wmat[xs * Ci:(xs + 1) * Ci,
                             d * Ws * Co + xx * Co:d * Ws * Co + (xx + 1) * Co] = w[d, kx]
        brow = np.tile(bvec, Ws)[None, :]
        packed["conv"].append((jnp.asarray(wmat), jnp.asarray(brow)))

    # y-shift matrices per spatial size (also implement the y zero-padding)
    packed["shifts"] = []
    for Ws in sizes:
        R = Ws * B
        sup = np.zeros((R, R), np.float32)     # out[r] = x[r + B]  (source y+1)
        sdn = np.zeros((R, R), np.float32)     # out[r] = x[r - B]  (source y-1)
        for r in range(R - B):
            sup[r, r + B] = 1.0
        for r in range(B, R):
            sdn[r, r - B] = 1.0
        packed["shifts"].append((jnp.asarray(sup), jnp.asarray(sdn)))

    # nearest-2x upsample matrices per block transition
    packed["ups"] = []
    W = 8
    for _ in range(blocks - 1):
        R_in = W * B
        D = np.zeros((2 * R_in, R_in), np.float32)
        for Y in range(2 * W):
            for bb in range(B):
                D[Y * B + bb, (Y // 2) * B + bb] = 1.0
        E = np.zeros((W * n, 2 * W * n), np.float32)
        for X in range(2 * W):
            for c in range(n):
                E[(X // 2) * n + c, X * n + c] = 1.0
        packed["ups"].append((jnp.asarray(D), jnp.asarray(E)))
        W *= 2
    return packed


# -----------------------------------------------------------------------------
# Wrapper
# -----------------------------------------------------------------------------
def generator_forward(z, packed, *, n, channel, blocks):
    B = z.shape[0]
    Wf = 8 * (2 ** (blocks - 1))
    inputs = [z, packed["fc_w"], packed["fc_b"],
              packed["rowdup"], packed["smask"], packed["sumblk"]]
    for wm, br in packed["conv"]:
        inputs += [wm, br]
    for su, sd in packed["shifts"]:
        inputs += [su, sd]
    for D, E in packed["ups"]:
        inputs += [D, E]

    kernel = functools.partial(_began_generator_kernel,
                               B=B, n=n, channel=channel, blocks=blocks)
    out2d = pl.pallas_call(
        kernel,
        out_shape=jax.ShapeDtypeStruct((Wf * B, Wf * channel), jnp.float32),
        in_specs=[pl.BlockSpec(a.shape, lambda: (0, 0)) for a in inputs],
        out_specs=pl.BlockSpec((Wf * B, Wf * channel), lambda: (0, 0)),
    )(*inputs)
    # rows = (y, b), lanes = (x, c)  ->  NCHW (B, channel, H, W); 6 KB glue op.
    return jnp.transpose(out2d.reshape(Wf, B, Wf, channel), (1, 3, 0, 2))


# -----------------------------------------------------------------------------
# Parameter construction (deterministic, mirrors generator_model.__init__)
# -----------------------------------------------------------------------------
def init_params(key, h, n, output_dims):
    channel, width, height = output_dims
    blocks = int(math.log2(width) - 2)
    params = {}
    k_fc_w, k_fc_b, key = jax.random.split(key, 3)
    params["fc_w"] = (jax.random.normal(k_fc_w, (h, 8 * 8 * n), jnp.float32)
                      / math.sqrt(h))
    params["fc_b"] = jax.random.normal(k_fc_b, (8 * 8 * n,), jnp.float32) * 0.01

    conv_shapes = []
    for _ in range(blocks):
        conv_shapes.append((n, n))
        conv_shapes.append((n, n))
    conv_shapes.append((n, channel))

    for i, (cin, cout) in enumerate(conv_shapes):
        kw, kb, key = jax.random.split(key, 3)
        fan_in = cin * 9
        params[f"conv{i}_w"] = (jax.random.normal(kw, (3, 3, cin, cout),
                                                  jnp.float32)
                                / math.sqrt(fan_in))
        params[f"conv{i}_b"] = jax.random.normal(kb, (cout,), jnp.float32) * 0.01
    return params, blocks


# -----------------------------------------------------------------------------
# Pure-JAX reference (correctness check only)
# -----------------------------------------------------------------------------
def generator_forward_ref(z, params, n, blocks):
    B = z.shape[0]
    fcout = z @ params["fc_w"] + params["fc_b"]
    x = jnp.transpose(fcout.reshape(B, n, 8, 8), (0, 2, 3, 1))

    def conv(x, w, b):
        y = jax.lax.conv_general_dilated(
            x, w, (1, 1), "SAME",
            dimension_numbers=("NHWC", "HWIO", "NHWC"))
        return y + b

    idx = 0
    for i in range(blocks):
        x = jax.nn.elu(conv(x, params[f"conv{idx}_w"], params[f"conv{idx}_b"])); idx += 1
        x = jax.nn.elu(conv(x, params[f"conv{idx}_w"], params[f"conv{idx}_b"])); idx += 1
        if blocks - 1 > i:
            x = jnp.repeat(jnp.repeat(x, 2, axis=1), 2, axis=2)
    x = conv(x, params[f"conv{idx}_w"], params[f"conv{idx}_b"])
    return jnp.transpose(x, (0, 3, 1, 2))


# -----------------------------------------------------------------------------
if __name__ == "__main__":
    # Small config consistent with the module: h=32, n=8, output_dims=(3,16,16)
    # => blocks = log2(16) - 2 = 2, output shape (B, 3, 16, 16).
    B, h, n = 2, 32, 8
    output_dims = (3, 16, 16)
    channel, width, height = output_dims

    key = jax.random.PRNGKey(0)
    k_params, k_z = jax.random.split(key)
    params, blocks = init_params(k_params, h, n, output_dims)
    z = jax.random.normal(k_z, (B, h), jnp.float32)

    packed = pack_params(params, B=B, n=n, channel=channel, blocks=blocks)
    out = jax.block_until_ready(
        generator_forward(z, packed, n=n, channel=channel, blocks=blocks))

    ref = jax.block_until_ready(generator_forward_ref(z, params, n, blocks))
    assert out.shape == (B, channel, height, width), out.shape
    max_err = float(jnp.max(jnp.abs(out - ref)))
    assert max_err < 2e-4, f"max abs err {max_err}"

    print("KERNEL_OK")
</pallas_src>

<mosaic_0001>
module attributes {stable_mosaic.version = 11 : i64} {
  func.func @_began_generator_kernel(%arg0: memref<2x32xf32, #tpu.memory_space<vmem>>, %arg1: memref<32x512xf32, #tpu.memory_space<vmem>>, %arg2: memref<1x512xf32, #tpu.memory_space<vmem>>, %arg3: memref<16x2xf32, #tpu.memory_space<vmem>>, %arg4: memref<16x512xf32, #tpu.memory_space<vmem>>, %arg5: memref<512x64xf32, #tpu.memory_space<vmem>>, %arg6: memref<64x192xf32, #tpu.memory_space<vmem>>, %arg7: memref<1x64xf32, #tpu.memory_space<vmem>>, %arg8: memref<64x192xf32, #tpu.memory_space<vmem>>, %arg9: memref<1x64xf32, #tpu.memory_space<vmem>>, %arg10: memref<128x384xf32, #tpu.memory_space<vmem>>, %arg11: memref<1x128xf32, #tpu.memory_space<vmem>>, %arg12: memref<128x384xf32, #tpu.memory_space<vmem>>, %arg13: memref<1x128xf32, #tpu.memory_space<vmem>>, %arg14: memref<128x144xf32, #tpu.memory_space<vmem>>, %arg15: memref<1x48xf32, #tpu.memory_space<vmem>>, %arg16: memref<16x16xf32, #tpu.memory_space<vmem>>, %arg17: memref<16x16xf32, #tpu.memory_space<vmem>>, %arg18: memref<32x32xf32, #tpu.memory_space<vmem>>, %arg19: memref<32x32xf32, #tpu.memory_space<vmem>>, %arg20: memref<32x16xf32, #tpu.memory_space<vmem>>, %arg21: memref<64x128xf32, #tpu.memory_space<vmem>>, %arg22: memref<32x48xf32, #tpu.memory_space<vmem>>) attributes {dimension_semantics = [], scalar_prefetch = 0 : i64, scratch_operands = 0 : i64, tpu.core_type = #tpu.core_type<tc>} {
    %c0 = arith.constant 0 : index
    %c0_0 = arith.constant 0 : index
    %0 = vector.load %arg0[%c0, %c0_0] : memref<2x32xf32, #tpu.memory_space<vmem>>, vector<2x32xf32>
    %c0_1 = arith.constant 0 : index
    %c0_2 = arith.constant 0 : index
    %1 = vector.load %arg1[%c0_1, %c0_2] : memref<32x512xf32, #tpu.memory_space<vmem>>, vector<32x512xf32>
    %cst = arith.constant dense<0.000000e+00> : vector<2x512xf32>
    %2 = tpu.matmul %0, %1, %cst {dimension_numbers = #tpu.dot_dimension_numbers<[1], [0], [0], [1], [0, 0, 1, 1], [], []>} : vector<2x32xf32>, vector<32x512xf32>, vector<2x512xf32> -> vector<2x512xf32>
    %c0_3 = arith.constant 0 : index
    %c0_4 = arith.constant 0 : index
    %3 = vector.load %arg2[%c0_3, %c0_4] : memref<1x512xf32, #tpu.memory_space<vmem>>, vector<1x512xf32>
    %4 = vector.broadcast %3 : vector<1x512xf32> to vector<2x512xf32>
    %5 = arith.addf %2, %4 : vector<2x512xf32>
    %c0_5 = arith.constant 0 : index
    %c0_6 = arith.constant 0 : index
    %6 = vector.load %arg3[%c0_5, %c0_6] : memref<16x2xf32, #tpu.memory_space<vmem>>, vector<16x2xf32>
    %cst_7 = arith.constant dense<0.000000e+00> : vector<16x512xf32>
    %7 = tpu.matmul %6, %5, %cst_7 {dimension_numbers = #tpu.dot_dimension_numbers<[1], [0], [0], [1], [0, 0, 1, 1], [], []>} : vector<16x2xf32>, vector<2x512xf32>, vector<16x512xf32> -> vector<16x512xf32>
    %c0_8 = arith.constant 0 : index
    %c0_9 = arith.constant 0 : index
    %8 = vector.load %arg4[%c0_8, %c0_9] : memref<16x512xf32, #tpu.memory_space<vmem>>, vector<16x512xf32>
    %9 = arith.mulf %7, %8 : vector<16x512xf32>
    %c0_10 = arith.constant 0 : index
    %c0_11 = arith.constant 0 : index
    %10 = vector.load %arg5[%c0_10, %c0_11] : memref<512x64xf32, #tpu.memory_space<vmem>>, vector<512x64xf32>
    %cst_12 = arith.constant dense<0.000000e+00> : vector<16x64xf32>
    %11 = tpu.matmul %9, %10, %cst_12 {dimension_numbers = #tpu.dot_dimension_numbers<[1], [0], [0], [1], [0, 0, 1, 1], [], []>} : vector<16x512xf32>, vector<512x64xf32>, vector<16x64xf32> -> vector<16x64xf32>
    %c0_13 = arith.constant 0 : index
    %c0_14 = arith.constant 0 : index
    %12 = vector.load %arg6[%c0_13, %c0_14] : memref<64x192xf32, #tpu.memory_space<vmem>>, vector<64x192xf32>
    %cst_15 = arith.constant dense<0.000000e+00> : vector<16x192xf32>
    %13 = tpu.matmul %11, %12, %cst_15 {dimension_numbers = #tpu.dot_dimension_numbers<[1], [0], [0], [1], [0, 0, 1, 1], [], []>} : vector<16x64xf32>, vector<64x192xf32>, vector<16x192xf32> -> vector<16x192xf32>
    %14 = vector.extract_strided_slice %13 {offsets = [0, 0], sizes = [16, 64], strides = [1, 1]} : vector<16x192xf32> to vector<16x64xf32>
    %15 = vector.extract_strided_slice %13 {offsets = [0, 64], sizes = [16, 64], strides = [1, 1]} : vector<16x192xf32> to vector<16x64xf32>
    %16 = vector.extract_strided_slice %13 {offsets = [0, 128], sizes = [16, 64], strides = [1, 1]} : vector<16x192xf32> to vector<16x64xf32>
    %c0_16 = arith.constant 0 : index
    %c0_17 = arith.constant 0 : index
    %17 = vector.load %arg17[%c0_16, %c0_17] : memref<16x16xf32, #tpu.memory_space<vmem>>, vector<16x16xf32>
    %cst_18 = arith.constant dense<0.000000e+00> : vector<16x64xf32>
    %18 = tpu.matmul %17, %14, %cst_18 {dimension_numbers = #tpu.dot_dimension_numbers<[1], [0], [0], [1], [0, 0, 1, 1], [], []>} : vector<16x16xf32>, vector<16x64xf32>, vector<16x64xf32> -> vector<16x64xf32>
    %19 = arith.addf %18, %15 : vector<16x64xf32>
    %c0_19 = arith.constant 0 : index
    %c0_20 = arith.constant 0 : index
    %20 = vector.load %arg16[%c0_19, %c0_20] : memref<16x16xf32, #tpu.memory_space<vmem>>, vector<16x16xf32>
    %cst_21 = arith.constant dense<0.000000e+00> : vector<16x64xf32>
    %21 = tpu.matmul %20, %16, %cst_21 {dimension_numbers = #tpu.dot_dimension_numbers<[1], [0], [0], [1], [0, 0, 1, 1], [], []>} : vector<16x16xf32>, vector<16x64xf32>, vector<16x64xf32> -> vector<16x64xf32>
    %22 = arith.addf %19, %21 : vector<16x64xf32>
    %c0_22 = arith.constant 0 : index
    %c0_23 = arith.constant 0 : index
    %23 = vector.load %arg7[%c0_22, %c0_23] : memref<1x64xf32, #tpu.memory_space<vmem>>, vector<1x64xf32>
    %24 = vector.broadcast %23 : vector<1x64xf32> to vector<16x64xf32>
    %25 = arith.addf %22, %24 : vector<16x64xf32>
    %cst_24 = arith.constant 0.000000e+00 : f32
    %26 = vector.broadcast %cst_24 : f32 to vector<16x64xf32>
    %27 = arith.cmpf ogt, %25, %26 : vector<16x64xf32>
    %cst_25 = arith.constant 0.000000e+00 : f32
    %28 = vector.broadcast %cst_25 : f32 to vector<16x64xf32>
    %29 = arith.minimumf %25, %28 : vector<16x64xf32>
    %30 = math.exp %29 : vector<16x64xf32>
    %cst_26 = arith.constant 1.000000e+00 : f32
    %31 = vector.broadcast %cst_26 : f32 to vector<16x64xf32>
    %32 = arith.subf %30, %31 : vector<16x64xf32>
    %33 = arith.select %27, %25, %32 : vector<16x64xi1>, vector<16x64xf32>
    %c0_27 = arith.constant 0 : index
    %c0_28 = arith.constant 0 : index
    %34 = vector.load %arg8[%c0_27, %c0_28] : memref<64x192xf32, #tpu.memory_space<vmem>>, vector<64x192xf32>
    %cst_29 = arith.constant dense<0.000000e+00> : vector<16x192xf32>
    %35 = tpu.matmul %33, %34, %cst_29 {dimension_numbers = #tpu.dot_dimension_numbers<[1], [0], [0], [1], [0, 0, 1, 1], [], []>} : vector<16x64xf32>, vector<64x192xf32>, vector<16x192xf32> -> vector<16x192xf32>
    %36 = vector.extract_strided_slice %35 {offsets = [0, 0], sizes = [16, 64], strides = [1, 1]} : vector<16x192xf32> to vector<16x64xf32>
    %37 = vector.extract_strided_slice %35 {offsets = [0, 64], sizes = [16, 64], strides = [1, 1]} : vector<16x192xf32> to vector<16x64xf32>
    %38 = vector.extract_strided_slice %35 {offsets = [0, 128], sizes = [16, 64], strides = [1, 1]} : vector<16x192xf32> to vector<16x64xf32>
    %c0_30 = arith.constant 0 : index
    %c0_31 = arith.constant 0 : index
    %39 = vector.load %arg17[%c0_30, %c0_31] : memref<16x16xf32, #tpu.memory_space<vmem>>, vector<16x16xf32>
    %cst_32 = arith.constant dense<0.000000e+00> : vector<16x64xf32>
    %40 = tpu.matmul %39, %36, %cst_32 {dimension_numbers = #tpu.dot_dimension_numbers<[1], [0], [0], [1], [0, 0, 1, 1], [], []>} : vector<16x16xf32>, vector<16x64xf32>, vector<16x64xf32> -> vector<16x64xf32>
    %41 = arith.addf %40, %37 : vector<16x64xf32>
    %c0_33 = arith.constant 0 : index
    %c0_34 = arith.constant 0 : index
    %42 = vector.load %arg16[%c0_33, %c0_34] : memref<16x16xf32, #tpu.memory_space<vmem>>, vector<16x16xf32>
    %cst_35 = arith.constant dense<0.000000e+00> : vector<16x64xf32>
    %43 = tpu.matmul %42, %38, %cst_35 {dimension_numbers = #tpu.dot_dimension_numbers<[1], [0], [0], [1], [0, 0, 1, 1], [], []>} : vector<16x16xf32>, vector<16x64xf32>, vector<16x64xf32> -> vector<16x64xf32>
    %44 = arith.addf %41, %43 : vector<16x64xf32>
    %c0_36 = arith.constant 0 : index
    %c0_37 = arith.constant 0 : index
    %45 = vector.load %arg9[%c0_36, %c0_37] : memref<1x64xf32, #tpu.memory_space<vmem>>, vector<1x64xf32>
    %46 = vector.broadcast %45 : vector<1x64xf32> to vector<16x64xf32>
    %47 = arith.addf %44, %46 : vector<16x64xf32>
    %cst_38 = arith.constant 0.000000e+00 : f32
    %48 = vector.broadcast %cst_38 : f32 to vector<16x64xf32>
    %49 = arith.cmpf ogt, %47, %48 : vector<16x64xf32>
    %cst_39 = arith.constant 0.000000e+00 : f32
    %50 = vector.broadcast %cst_39 : f32 to vector<16x64xf32>
    %51 = arith.minimumf %47, %50 : vector<16x64xf32>
    %52 = math.exp %51 : vector<16x64xf32>
    %cst_40 = arith.constant 1.000000e+00 : f32
    %53 = vector.broadcast %cst_40 : f32 to vector<16x64xf32>
    %54 = arith.subf %52, %53 : vector<16x64xf32>
    %55 = arith.select %49, %47, %54 : vector<16x64xi1>, vector<16x64xf32>
    %c0_41 = arith.constant 0 : index
    %c0_42 = arith.constant 0 : index
    %56 = vector.load %arg21[%c0_41, %c0_42] : memref<64x128xf32, #tpu.memory_space<vmem>>, vector<64x128xf32>
    %cst_43 = arith.constant dense<0.000000e+00> : vector<16x128xf32>
    %57 = tpu.matmul %55, %56, %cst_43 {dimension_numbers = #tpu.dot_dimension_numbers<[1], [0], [0], [1], [0, 0, 1, 1], [], []>} : vector<16x64xf32>, vector<64x128xf32>, vector<16x128xf32> -> vector<16x128xf32>
    %c0_44 = arith.constant 0 : index
    %c0_45 = arith.constant 0 : index
    %58 = vector.load %arg20[%c0_44, %c0_45] : memref<32x16xf32, #tpu.memory_space<vmem>>, vector<32x16xf32>
    %cst_46 = arith.constant dense<0.000000e+00> : vector<32x128xf32>
    %59 = tpu.matmul %58, %57, %cst_46 {dimension_numbers = #tpu.dot_dimension_numbers<[1], [0], [0], [1], [0, 0, 1, 1], [], []>} : vector<32x16xf32>, vector<16x128xf32>, vector<32x128xf32> -> vector<32x128xf32>
    %c0_47 = arith.constant 0 : index
    %c0_48 = arith.constant 0 : index
    %60 = vector.load %arg10[%c0_47, %c0_48] : memref<128x384xf32, #tpu.memory_space<vmem>>, vector<128x384xf32>
    %cst_49 = arith.constant dense<0.000000e+00> : vector<32x384xf32>
    %61 = tpu.matmul %59, %60, %cst_49 {dimension_numbers = #tpu.dot_dimension_numbers<[1], [0], [0], [1], [0, 0, 1, 1], [], []>} : vector<32x128xf32>, vector<128x384xf32>, vector<32x384xf32> -> vector<32x384xf32>
    %62 = vector.extract_strided_slice %61 {offsets = [0, 0], sizes = [32, 128], strides = [1, 1]} : vector<32x384xf32> to vector<32x128xf32>
    %63 = vector.extract_strided_slice %61 {offsets = [0, 128], sizes = [32, 128], strides = [1, 1]} : vector<32x384xf32> to vector<32x128xf32>
    %64 = vector.extract_strided_slice %61 {offsets = [0, 256], sizes = [32, 128], strides = [1, 1]} : vector<32x384xf32> to vector<32x128xf32>
    %c0_50 = arith.constant 0 : index
    %c0_51 = arith.constant 0 : index
    %65 = vector.load %arg19[%c0_50, %c0_51] : memref<32x32xf32, #tpu.memory_space<vmem>>, vector<32x32xf32>
    %cst_52 = arith.constant dense<0.000000e+00> : vector<32x128xf32>
    %66 = tpu.matmul %65, %62, %cst_52 {dimension_numbers = #tpu.dot_dimension_numbers<[1], [0], [0], [1], [0, 0, 1, 1], [], []>} : vector<32x32xf32>, vector<32x128xf32>, vector<32x128xf32> -> vector<32x128xf32>
    %67 = arith.addf %66, %63 : vector<32x128xf32>
    %c0_53 = arith.constant 0 : index
    %c0_54 = arith.constant 0 : index
    %68 = vector.load %arg18[%c0_53, %c0_54] : memref<32x32xf32, #tpu.memory_space<vmem>>, vector<32x32xf32>
    %cst_55 = arith.constant dense<0.000000e+00> : vector<32x128xf32>
    %69 = tpu.matmul %68, %64, %cst_55 {dimension_numbers = #tpu.dot_dimension_numbers<[1], [0], [0], [1], [0, 0, 1, 1], [], []>} : vector<32x32xf32>, vector<32x128xf32>, vector<32x128xf32> -> vector<32x128xf32>
    %70 = arith.addf %67, %69 : vector<32x128xf32>
    %c0_56 = arith.constant 0 : index
    %c0_57 = arith.constant 0 : index
    %71 = vector.load %arg11[%c0_56, %c0_57] : memref<1x128xf32, #tpu.memory_space<vmem>>, vector<1x128xf32>
    %72 = vector.broadcast %71 : vector<1x128xf32> to vector<32x128xf32>
    %73 = arith.addf %70, %72 : vector<32x128xf32>
    %cst_58 = arith.constant 0.000000e+00 : f32
    %74 = vector.broadcast %cst_58 : f32 to vector<32x128xf32>
    %75 = arith.cmpf ogt, %73, %74 : vector<32x128xf32>
    %cst_59 = arith.constant 0.000000e+00 : f32
    %76 = vector.broadcast %cst_59 : f32 to vector<32x128xf32>
    %77 = arith.minimumf %73, %76 : vector<32x128xf32>
    %78 = math.exp %77 : vector<32x128xf32>
    %cst_60 = arith.constant 1.000000e+00 : f32
    %79 = vector.broadcast %cst_60 : f32 to vector<32x128xf32>
    %80 = arith.subf %78, %79 : vector<32x128xf32>
    %81 = arith.select %75, %73, %80 : vector<32x128xi1>, vector<32x128xf32>
    %c0_61 = arith.constant 0 : index
    %c0_62 = arith.constant 0 : index
    %82 = vector.load %arg12[%c0_61, %c0_62] : memref<128x384xf32, #tpu.memory_space<vmem>>, vector<128x384xf32>
    %cst_63 = arith.constant dense<0.000000e+00> : vector<32x384xf32>
    %83 = tpu.matmul %81, %82, %cst_63 {dimension_numbers = #tpu.dot_dimension_numbers<[1], [0], [0], [1], [0, 0, 1, 1], [], []>} : vector<32x128xf32>, vector<128x384xf32>, vector<32x384xf32> -> vector<32x384xf32>
    %84 = vector.extract_strided_slice %83 {offsets = [0, 0], sizes = [32, 128], strides = [1, 1]} : vector<32x384xf32> to vector<32x128xf32>
    %85 = vector.extract_strided_slice %83 {offsets = [0, 128], sizes = [32, 128], strides = [1, 1]} : vector<32x384xf32> to vector<32x128xf32>
    %86 = vector.extract_strided_slice %83 {offsets = [0, 256], sizes = [32, 128], strides = [1, 1]} : vector<32x384xf32> to vector<32x128xf32>
    %c0_64 = arith.constant 0 : index
    %c0_65 = arith.constant 0 : index
    %87 = vector.load %arg19[%c0_64, %c0_65] : memref<32x32xf32, #tpu.memory_space<vmem>>, vector<32x32xf32>
    %cst_66 = arith.constant dense<0.000000e+00> : vector<32x128xf32>
    %88 = tpu.matmul %87, %84, %cst_66 {dimension_numbers = #tpu.dot_dimension_numbers<[1], [0], [0], [1], [0, 0, 1, 1], [], []>} : vector<32x32xf32>, vector<32x128xf32>, vector<32x128xf32> -> vector<32x128xf32>
    %89 = arith.addf %88, %85 : vector<32x128xf32>
    %c0_67 = arith.constant 0 : index
    %c0_68 = arith.constant 0 : index
    %90 = vector.load %arg18[%c0_67, %c0_68] : memref<32x32xf32, #tpu.memory_space<vmem>>, vector<32x32xf32>
    %cst_69 = arith.constant dense<0.000000e+00> : vector<32x128xf32>
    %91 = tpu.matmul %90, %86, %cst_69 {dimension_numbers = #tpu.dot_dimension_numbers<[1], [0], [0], [1], [0, 0, 1, 1], [], []>} : vector<32x32xf32>, vector<32x128xf32>, vector<32x128xf32> -> vector<32x128xf32>
    %92 = arith.addf %89, %91 : vector<32x128xf32>
    %c0_70 = arith.constant 0 : index
    %c0_71 = arith.constant 0 : index
    %93 = vector.load %arg13[%c0_70, %c0_71] : memref<1x128xf32, #tpu.memory_space<vmem>>, vector<1x128xf32>
    %94 = vector.broadcast %93 : vector<1x128xf32> to vector<32x128xf32>
    %95 = arith.addf %92, %94 : vector<32x128xf32>
    %cst_72 = arith.constant 0.000000e+00 : f32
    %96 = vector.broadcast %cst_72 : f32 to vector<32x128xf32>
    %97 = arith.cmpf ogt, %95, %96 : vector<32x128xf32>
    %cst_73 = arith.constant 0.000000e+00 : f32
    %98 = vector.broadcast %cst_73 : f32 to vector<32x128xf32>
    %99 = arith.minimumf %95, %98 : vector<32x128xf32>
    %100 = math.exp %99 : vector<32x128xf32>
    %cst_74 = arith.constant 1.000000e+00 : f32
    %101 = vector.broadcast %cst_74 : f32 to vector<32x128xf32>
    %102 = arith.subf %100, %101 : vector<32x128xf32>
    %103 = arith.select %97, %95, %102 : vector<32x128xi1>, vector<32x128xf32>
    %c0_75 = arith.constant 0 : index
    %c0_76 = arith.constant 0 : index
    %104 = vector.load %arg14[%c0_75, %c0_76] : memref<128x144xf32, #tpu.memory_space<vmem>>, vector<128x144xf32>
    %cst_77 = arith.constant dense<0.000000e+00> : vector<32x144xf32>
    %105 = tpu.matmul %103, %104, %cst_77 {dimension_numbers = #tpu.dot_dimension_numbers<[1], [0], [0], [1], [0, 0, 1, 1], [], []>} : vector<32x128xf32>, vector<128x144xf32>, vector<32x144xf32> -> vector<32x144xf32>
    %106 = vector.extract_strided_slice %105 {offsets = [0, 0], sizes = [32, 48], strides = [1, 1]} : vector<32x144xf32> to vector<32x48xf32>
    %107 = vector.extract_strided_slice %105 {offsets = [0, 48], sizes = [32, 48], strides = [1, 1]} : vector<32x144xf32> to vector<32x48xf32>
    %108 = vector.extract_strided_slice %105 {offsets = [0, 96], sizes = [32, 48], strides = [1, 1]} : vector<32x144xf32> to vector<32x48xf32>
    %c0_78 = arith.constant 0 : index
    %c0_79 = arith.constant 0 : index
    %109 = vector.load %arg19[%c0_78, %c0_79] : memref<32x32xf32, #tpu.memory_space<vmem>>, vector<32x32xf32>
    %cst_80 = arith.constant dense<0.000000e+00> : vector<32x48xf32>
    %110 = tpu.matmul %109, %106, %cst_80 {dimension_numbers = #tpu.dot_dimension_numbers<[1], [0], [0], [1], [0, 0, 1, 1], [], []>} : vector<32x32xf32>, vector<32x48xf32>, vector<32x48xf32> -> vector<32x48xf32>
    %111 = arith.addf %110, %107 : vector<32x48xf32>
    %c0_81 = arith.constant 0 : index
    %c0_82 = arith.constant 0 : index
    %112 = vector.load %arg18[%c0_81, %c0_82] : memref<32x32xf32, #tpu.memory_space<vmem>>, vector<32x32xf32>
    %cst_83 = arith.constant dense<0.000000e+00> : vector<32x48xf32>
    %113 = tpu.matmul %112, %108, %cst_83 {dimension_numbers = #tpu.dot_dimension_numbers<[1], [0], [0], [1], [0, 0, 1, 1], [], []>} : vector<32x32xf32>, vector<32x48xf32>, vector<32x48xf32> -> vector<32x48xf32>
    %114 = arith.addf %111, %113 : vector<32x48xf32>
    %c0_84 = arith.constant 0 : index
    %c0_85 = arith.constant 0 : index
    %115 = vector.load %arg15[%c0_84, %c0_85] : memref<1x48xf32, #tpu.memory_space<vmem>>, vector<1x48xf32>
    %116 = vector.broadcast %115 : vector<1x48xf32> to vector<32x48xf32>
    %117 = arith.addf %114, %116 : vector<32x48xf32>
    %c0_86 = arith.constant 0 : index
    %c0_87 = arith.constant 0 : index
    %118 = vector.load %arg22[%c0_86, %c0_87] : memref<32x48xf32, #tpu.memory_space<vmem>>, vector<32x48xf32>
    tpu.vector_store %arg22[%c0_86, %c0_87], %117 {strides = array<i32>} : memref<32x48xf32, #tpu.memory_space<vmem>>, vector<32x48xf32>,
    return
  }
}

</mosaic_0001>

<llo_original>
// kernel: tpu_custom_call.1
$region0: #{tpu_custom_call.1}
  #allocation0 [shape = 'u32[]', space=smem, size = 0x4, offset = 0x4, fixed_abs, tag = 'smem constant byte address 0x4 - core index']
  #allocation1 [shape = 'u32[72,128]{1,0:T(1,128)}', space=vmem, size = 0x9000, scoped, tag = 'internal scratch']
  %s0 = inlined_call_operand.hbm [shape: f32[2,32], index: 0, kind: input, shape index: {}]
  %s1 = inlined_call_operand.vmem [shape: f32[32,512], index: 1, kind: input, shape index: {}]
  %s2 = inlined_call_operand.hbm [shape: f32[1,512], index: 2, kind: input, shape index: {}]
  %s3 = inlined_call_operand.vmem [shape: f32[16,2], index: 3, kind: input, shape index: {}]
  %s4 = inlined_call_operand.vmem [shape: f32[16,512], index: 4, kind: input, shape index: {}]
  %s5 = inlined_call_operand.vmem [shape: f32[512,64], index: 5, kind: input, shape index: {}]
  %s6 = inlined_call_operand.hbm [shape: f32[64,192], index: 6, kind: input, shape index: {}]
  %s7 = inlined_call_operand.hbm [shape: f32[1,64], index: 7, kind: input, shape index: {}]
  %s8 = inlined_call_operand.hbm [shape: f32[64,192], index: 8, kind: input, shape index: {}]
  %s9 = inlined_call_operand.hbm [shape: f32[1,64], index: 9, kind: input, shape index: {}]
  %s10 = inlined_call_operand.vmem [shape: f32[128,384], index: 10, kind: input, shape index: {}]
  %s11 = inlined_call_operand.hbm [shape: f32[1,128], index: 11, kind: input, shape index: {}]
  %s12 = inlined_call_operand.vmem [shape: f32[128,384], index: 12, kind: input, shape index: {}]
  %s13 = inlined_call_operand.hbm [shape: f32[1,128], index: 13, kind: input, shape index: {}]
  %s14 = inlined_call_operand.vmem [shape: f32[128,144], index: 14, kind: input, shape index: {}]
  %s15 = inlined_call_operand.hbm [shape: f32[1,48], index: 15, kind: input, shape index: {}]
  %s16 = inlined_call_operand.vmem [shape: f32[16,16], index: 16, kind: input, shape index: {}]
  %s17 = inlined_call_operand.hbm [shape: f32[16,16], index: 17, kind: input, shape index: {}]
  %s18 = inlined_call_operand.hbm [shape: f32[32,32], index: 18, kind: input, shape index: {}]
  %s19 = inlined_call_operand.hbm [shape: f32[32,32], index: 19, kind: input, shape index: {}]
  %s20 = inlined_call_operand.vmem [shape: f32[32,16], index: 20, kind: input, shape index: {}]
  %s21 = inlined_call_operand.hbm [shape: f32[64,128], index: 21, kind: input, shape index: {}]
  %s22 = inlined_call_operand.hbm [shape: f32[32,48], index: 22, kind: output, shape index: {}]
  %s23 = sld [smem:[#allocation0]]
  $region150: #{tpu_custom_call.1} parent=0
    _
  %s25 = ssub.s32 1, %s23
  %s26 = scalar_select 0, %s25, %s23
  $region1: #{tpu_custom_call.1} parent=0
    #allocation2 [shape = 'u8[1024]{0}', space=vmem, size = 0x400, scoped, tag = 'input window, operand 0, single buffered']
    #allocation3 [shape = 's32[1]{0}', space=sflag, size = 0x4, scoped, tag = 'scoped memory for tpu_custom_call.1']
    #allocation4 [shape = 's32[1]{0}', space=sflag, size = 0x4, scoped, tag = 'scoped memory for tpu_custom_call.1']
    #allocation5 [shape = 'u8[2048]{0}', space=vmem, size = 0x800, scoped, tag = 'input window, operand 2, single buffered']
    #allocation6 [shape = 's32[1]{0}', space=sflag, size = 0x4, scoped, tag = 'scoped memory for tpu_custom_call.1']
    #allocation7 [shape = 'u8[65536]{0}', space=vmem, size = 0x10000, scoped, tag = 'input window, operand 6, single buffered']
    #allocation8 [shape = 'u8[512]{0}', space=vmem, size = 0x400, scoped, tag = 'input window, operand 7, single buffered']
    #allocation9 [shape = 's32[1]{0}', space=sflag, size = 0x4, scoped, tag = 'scoped memory for tpu_custom_call.1']
    #allocation10 [shape = 'u8[65536]{0}', space=vmem, size = 0x10000, scoped, tag = 'input window, operand 8, single buffered']
    #allocation11 [shape = 'u8[512]{0}', space=vmem, size = 0x400, scoped, tag = 'input window, operand 9, single buffered']
    #allocation12 [shape = 's32[1]{0}', space=sflag, size = 0x4, scoped, tag = 'scoped memory for tpu_custom_call.1']
    #allocation13 [shape = 'u8[512]{0}', space=vmem, size = 0x400, scoped, tag = 'input window, operand 11, single buffered']
    #allocation14 [shape = 'u8[512]{0}', space=vmem, size = 0x400, scoped, tag = 'input window, operand 13, single buffered']
    #allocation15 [shape = 's32[1]{0}', space=sflag, size = 0x4, scoped, tag = 'scoped memory for tpu_custom_call.1']
    #allocation16 [shape = 'u8[512]{0}', space=vmem, size = 0x400, scoped, tag = 'input window, operand 15, single buffered']
    #allocation17 [shape = 'u8[8192]{0}', space=vmem, size = 0x2000, scoped, tag = 'input window, operand 17, single buffered']
    #allocation18 [shape = 's32[1]{0}', space=sflag, size = 0x4, scoped, tag = 'scoped memory for tpu_custom_call.1']
    #allocation19 [shape = 'u8[16384]{0}', space=vmem, size = 0x4000, scoped, tag = 'input window, operand 18, single buffered']
    #allocation20 [shape = 'u8[16384]{0}', space=vmem, size = 0x4000, scoped, tag = 'input window, operand 19, single buffered']
    #allocation21 [shape = 's32[1]{0}', space=sflag, size = 0x4, scoped, tag = 'scoped memory for tpu_custom_call.1']
    #allocation22 [shape = 'u8[32768]{0}', space=vmem, size = 0x8000, scoped, tag = 'input window, operand 21, single buffered']
    #allocation23 [shape = 'u8[16384]{0}', space=vmem, size = 0x4000, scoped, tag = 'output window, operand 0, single buffered']
    %27 = vsyncpa [#allocation3], 0
    %28 = vsyncpa [#allocation6], 0
    %29 = vsyncpa [#allocation9], 0
    %30 = vsyncpa [#allocation12], 0
    %31 = vsyncpa [#allocation15], 0
    %32 = vsyncpa [#allocation18], 0
    %33 = vsyncpa [#allocation21], 0
    %34 = vsyncpa [#allocation4], 0
    // Predicated region
    $region2: #{tpu_custom_call.1} parent=1 // pred_check
      _
    $region3: #{tpu_custom_call.1} parent=1 // pred_check_branch
      %36 = sbr.rel (0) target = $region5
    $region4: #{tpu_custom_call.1} parent=1 // pred_region
      %38 = vsyncadd [#allocation3], 0
      %s40 = sshll.u32 %s0, 4
      %s41 = int_to_ptr.hbm [resolvable:$true] %s40
      %s42 = sshll.u32 [#allocation2], 4
      %s43 = int_to_ptr.vmem [resolvable:$true] %s42
      %45 = dma.hbm_to_vmem [thread:$0]  %s41, 32, %s43, [#allocation3]
    $region5: #{tpu_custom_call.1} parent=1 // pred_fallthru
      _
    // Predicated region
    $region6: #{tpu_custom_call.1} parent=1 // pred_check
      _
    $region7: #{tpu_custom_call.1} parent=1 // pred_check_branch
      %47 = sbr.rel (0) target = $region9
    $region8: #{tpu_custom_call.1} parent=1 // pred_region
      _
    $region9: #{tpu_custom_call.1} parent=1 // pred_fallthru
      _
    // Predicated region
    $region10: #{tpu_custom_call.1} parent=1 // pred_check
      _
    $region11: #{tpu_custom_call.1} parent=1 // pred_check_branch
      %49 = sbr.rel (0) target = $region13
    $region12: #{tpu_custom_call.1} parent=1 // pred_region
      %51 = vsyncadd [#allocation6], 0
      %s53 = sshll.u32 %s2, 4
      %s54 = int_to_ptr.hbm [resolvable:$true] %s53
      %s55 = sshll.u32 [#allocation5], 4
      %s56 = int_to_ptr.vmem [resolvable:$true] %s55
      %58 = dma.hbm_to_vmem [thread:$0]  %s54, 64, %s56, [#allocation6]
    $region13: #{tpu_custom_call.1} parent=1 // pred_fallthru
      _
    // Predicated region
    $region14: #{tpu_custom_call.1} parent=1 // pred_check
      _
    $region15: #{tpu_custom_call.1} parent=1 // pred_check_branch
      %60 = sbr.rel (0) target = $region17
    $region16: #{tpu_custom_call.1} parent=1 // pred_region
      _
    $region17: #{tpu_custom_call.1} parent=1 // pred_fallthru
      _
    // Predicated region
    $region18: #{tpu_custom_call.1} parent=1 // pred_check
      _
    $region19: #{tpu_custom_call.1} parent=1 // pred_check_branch
      %62 = sbr.rel (0) target = $region21
    $region20: #{tpu_custom_call.1} parent=1 // pred_region
      _
    $region21: #{tpu_custom_call.1} parent=1 // pred_fallthru
      _
    // Predicated region
    $region22: #{tpu_custom_call.1} parent=1 // pred_check
      _
    $region23: #{tpu_custom_call.1} parent=1 // pred_check_branch
      %64 = sbr.rel (0) target = $region25
    $region24: #{tpu_custom_call.1} parent=1 // pred_region
      _
    $region25: #{tpu_custom_call.1} parent=1 // pred_fallthru
      _
    // Predicated region
    $region26: #{tpu_custom_call.1} parent=1 // pred_check
      _
    $region27: #{tpu_custom_call.1} parent=1 // pred_check_branch
      %66 = sbr.rel (0) target = $region29
    $region28: #{tpu_custom_call.1} parent=1 // pred_region
      %68 = vsyncadd [#allocation6], 0
      %s69 = sshll.u32 %s6, 4
      %s70 = int_to_ptr.hbm [resolvable:$true] %s69
      %s71 = sshll.u32 [#allocation7], 4
      %s72 = int_to_ptr.vmem [resolvable:$true] %s71
      %77 = dma.hbm_to_vmem [thread:$0]  %s70, 2048, %s72, [#allocation6], 256, 256, 16
    $region29: #{tpu_custom_call.1} parent=1 // pred_fallthru
      _
    // Predicated region
    $region30: #{tpu_custom_call.1} parent=1 // pred_check
      _
    $region31: #{tpu_custom_call.1} parent=1 // pred_check_branch
      %79 = sbr.rel (0) target = $region33
    $region32: #{tpu_custom_call.1} parent=1 // pred_region
      %81 = vsyncadd [#allocation9], 0
      %s83 = sshll.u32 %s7, 4
      %s84 = int_to_ptr.hbm [resolvable:$true] %s83
      %s85 = sshll.u32 [#allocation8], 4
      %s86 = int_to_ptr.vmem [resolvable:$true] %s85
      %88 = dma.hbm_to_vmem [thread:$0]  %s84, 16, %s86, [#allocation9]
    $region33: #{tpu_custom_call.1} parent=1 // pred_fallthru
      _
    // Predicated region
    $region34: #{tpu_custom_call.1} parent=1 // pred_check
      _
    $region35: #{tpu_custom_call.1} parent=1 // pred_check_branch
      %90 = sbr.rel (0) target = $region37
    $region36: #{tpu_custom_call.1} parent=1 // pred_region
      %92 = vsyncadd [#allocation9], 0
      %s93 = sshll.u32 %s8, 4
      %s94 = int_to_ptr.hbm [resolvable:$true] %s93
      %s95 = sshll.u32 [#allocation10], 4
      %s96 = int_to_ptr.vmem [resolvable:$true] %s95
      %101 = dma.hbm_to_vmem [thread:$0]  %s94, 2048, %s96, [#allocation9], 256, 256, 16
    $region37: #{tpu_custom_call.1} parent=1 // pred_fallthru
      _
    // Predicated region
    $region38: #{tpu_custom_call.1} parent=1 // pred_check
      _
    $region39: #{tpu_custom_call.1} parent=1 // pred_check_branch
      %103 = sbr.rel (0) target = $region41
    $region40: #{tpu_custom_call.1} parent=1 // pred_region
      %105 = vsyncadd [#allocation12], 0
      %s107 = sshll.u32 %s9, 4
      %s108 = int_to_ptr.hbm [resolvable:$true] %s107
      %s109 = sshll.u32 [#allocation11], 4
      %s110 = int_to_ptr.vmem [resolvable:$true] %s109
      %112 = dma.hbm_to_vmem [thread:$0]  %s108, 16, %s110, [#allocation12]
    $region41: #{tpu_custom_call.1} parent=1 // pred_fallthru
      _
    // Predicated region
    $region42: #{tpu_custom_call.1} parent=1 // pred_check
      _
    $region43: #{tpu_custom_call.1} parent=1 // pred_check_branch
      %114 = sbr.rel (0) target = $region45
    $region44: #{tpu_custom_call.1} parent=1 // pred_region
      _
    $region45: #{tpu_custom_call.1} parent=1 // pred_fallthru
      _
    // Predicated region
    $region46: #{tpu_custom_call.1} parent=1 // pred_check
      _
    $region47: #{tpu_custom_call.1} parent=1 // pred_check_branch
      %116 = sbr.rel (0) target = $region49
    $region48: #{tpu_custom_call.1} parent=1 // pred_region
      %118 = vsyncadd [#allocation12], 0
      %s120 = sshll.u32 %s11, 4
      %s121 = int_to_ptr.hbm [resolvable:$true] %s120
      %s122 = sshll.u32 [#allocation13], 4
      %s123 = int_to_ptr.vmem [resolvable:$true] %s122
      %125 = dma.hbm_to_vmem [thread:$0]  %s121, 16, %s123, [#allocation12]
    $region49: #{tpu_custom_call.1} parent=1 // pred_fallthru
      _
    // Predicated region
    $region50: #{tpu_custom_call.1} parent=1 // pred_check
      _
    $region51: #{tpu_custom_call.1} parent=1 // pred_check_branch
      %127 = sbr.rel (0) target = $region53
    $region52: #{tpu_custom_call.1} parent=1 // pred_region
      _
    $region53: #{tpu_custom_call.1} parent=1 // pred_fallthru
      _
    // Predicated region
    $region54: #{tpu_custom_call.1} parent=1 // pred_check
      _
    $region55: #{tpu_custom_call.1} parent=1 // pred_check_branch
      %129 = sbr.rel (0) target = $region57
    $region56: #{tpu_custom_call.1} parent=1 // pred_region
      %131 = vsyncadd [#allocation15], 0
      %s133 = sshll.u32 %s13, 4
      %s134 = int_to_ptr.hbm [resolvable:$true] %s133
      %s135 = sshll.u32 [#allocation14], 4
      %s136 = int_to_ptr.vmem [resolvable:$true] %s135
      %138 = dma.hbm_to_vmem [thread:$0]  %s134, 16, %s136, [#allocation15]
    $region57: #{tpu_custom_call.1} parent=1 // pred_fallthru
      _
    // Predicated region
    $region58: #{tpu_custom_call.1} parent=1 // pred_check
      _
    $region59: #{tpu_custom_call.1} parent=1 // pred_check_branch
      %140 = sbr.rel (0) target = $region61
    $region60: #{tpu_custom_call.1} parent=1 // pred_region
      _
    $region61: #{tpu_custom_call.1} parent=1 // pred_fallthru
      _
    // Predicated region
    $region62: #{tpu_custom_call.1} parent=1 // pred_check
      _
    $region63: #{tpu_custom_call.1} parent=1 // pred_check_branch
      %142 = sbr.rel (0) target = $region65
    $region64: #{tpu_custom_call.1} parent=1 // pred_region
      %144 = vsyncadd [#allocation15], 0
      %s146 = sshll.u32 %s15, 4
      %s147 = int_to_ptr.hbm [resolvable:$true] %s146
      %s148 = sshll.u32 [#allocation16], 4
      %s149 = int_to_ptr.vmem [resolvable:$true] %s148
      %151 = dma.hbm_to_vmem [thread:$0]  %s147, 16, %s149, [#allocation15]
    $region65: #{tpu_custom_call.1} parent=1 // pred_fallthru
      _
    // Predicated region
    $region66: #{tpu_custom_call.1} parent=1 // pred_check
      _
    $region67: #{tpu_custom_call.1} parent=1 // pred_check_branch
      %153 = sbr.rel (0) target = $region69
    $region68: #{tpu_custom_call.1} parent=1 // pred_region
      _
    $region69: #{tpu_custom_call.1} parent=1 // pred_fallthru
      _
    // Predicated region
    $region70: #{tpu_custom_call.1} parent=1 // pred_check
      _
    $region71: #{tpu_custom_call.1} parent=1 // pred_check_branch
      %155 = sbr.rel (0) target = $region73
    $region72: #{tpu_custom_call.1} parent=1 // pred_region
      %157 = vsyncadd [#allocation18], 0
      %s158 = sshll.u32 %s17, 4
      %s159 = int_to_ptr.hbm [resolvable:$true] %s158
      %s160 = sshll.u32 [#allocation17], 4
      %s161 = int_to_ptr.vmem [resolvable:$true] %s160
      %166 = dma.hbm_to_vmem [thread:$0]  %s159, 256, %s161, [#allocation18], 128, 128, 8
    $region73: #{tpu_custom_call.1} parent=1 // pred_fallthru
      _
    // Predicated region
    $region74: #{tpu_custom_call.1} parent=1 // pred_check
      _
    $region75: #{tpu_custom_call.1} parent=1 // pred_check_branch
      %168 = sbr.rel (0) target = $region77
    $region76: #{tpu_custom_call.1} parent=1 // pred_region
      %170 = vsyncadd [#allocation18], 0
      %s171 = sshll.u32 %s18, 4
      %s172 = int_to_ptr.hbm [resolvable:$true] %s171
      %s173 = sshll.u32 [#allocation19], 4
      %s174 = int_to_ptr.vmem [resolvable:$true] %s173
      %179 = dma.hbm_to_vmem [thread:$0]  %s172, 512, %s174, [#allocation18], 128, 128, 8
    $region77: #{tpu_custom_call.1} parent=1 // pred_fallthru
      _
    // Predicated region
    $region78: #{tpu_custom_call.1} parent=1 // pred_check
      _
    $region79: #{tpu_custom_call.1} parent=1 // pred_check_branch
      %181 = sbr.rel (0) target = $region81
    $region80: #{tpu_custom_call.1} parent=1 // pred_region
      %183 = vsyncadd [#allocation21], 0
      %s184 = sshll.u32 %s19, 4
      %s185 = int_to_ptr.hbm [resolvable:$true] %s184
      %s186 = sshll.u32 [#allocation20], 4
      %s187 = int_to_ptr.vmem [resolvable:$true] %s186
      %192 = dma.hbm_to_vmem [thread:$0]  %s185, 512, %s187, [#allocation21], 128, 128, 8
    $region81: #{tpu_custom_call.1} parent=1 // pred_fallthru
      _
    // Predicated region
    $region82: #{tpu_custom_call.1} parent=1 // pred_check
      _
    $region83: #{tpu_custom_call.1} parent=1 // pred_check_branch
      %194 = sbr.rel (0) target = $region85
    $region84: #{tpu_custom_call.1} parent=1 // pred_region
      _
    $region85: #{tpu_custom_call.1} parent=1 // pred_fallthru
      _
    // Predicated region
    $region86: #{tpu_custom_call.1} parent=1 // pred_check
      _
    $region87: #{tpu_custom_call.1} parent=1 // pred_check_branch
      %196 = sbr.rel (0) target = $region89
    $region88: #{tpu_custom_call.1} parent=1 // pred_region
      %198 = vsyncadd [#allocation21], 0
      %s199 = sshll.u32 %s21, 4
      %s200 = int_to_ptr.hbm [resolvable:$true] %s199
      %s201 = sshll.u32 [#allocation22], 4
      %s202 = int_to_ptr.vmem [resolvable:$true] %s201
      %207 = dma.hbm_to_vmem [thread:$0]  %s200, 1024, %s202, [#allocation21], 128, 128, 8
    $region89: #{tpu_custom_call.1} parent=1 // pred_fallthru
      _
    // Predicated region
    $region90: #{tpu_custom_call.1} parent=1 // pred_check
      _
    $region91: #{tpu_custom_call.1} parent=1 // pred_check_branch
      %209 = sbr.rel (0) target = $region93
    $region92: #{tpu_custom_call.1} parent=1 // pred_region
      %211 = dma.done [#allocation3], 32
    $region93: #{tpu_custom_call.1} parent=1 // pred_fallthru
      _
    // Predicated region
    $region94: #{tpu_custom_call.1} parent=1 // pred_check
      _
    $region95: #{tpu_custom_call.1} parent=1 // pred_check_branch
      %213 = sbr.rel (0) target = $region97
    $region96: #{tpu_custom_call.1} parent=1 // pred_region
      %215 = dma.done [#allocation6], 64
    $region97: #{tpu_custom_call.1} parent=1 // pred_fallthru
      _
    // Predicated region
    $region98: #{tpu_custom_call.1} parent=1 // pred_check
      _
    $region99: #{tpu_custom_call.1} parent=1 // pred_check_branch
      %217 = sbr.rel (0) target = $region101
    $region100: #{tpu_custom_call.1} parent=1 // pred_region
      %219 = dma.done [#allocation6], 2048
    $region101: #{tpu_custom_call.1} parent=1 // pred_fallthru
      _
    // Predicated region
    $region102: #{tpu_custom_call.1} parent=1 // pred_check
      _
    $region103: #{tpu_custom_call.1} parent=1 // pred_check_branch
      %221 = sbr.rel (0) target = $region105
    $region104: #{tpu_custom_call.1} parent=1 // pred_region
      %223 = dma.done [#allocation9], 16
    $region105: #{tpu_custom_call.1} parent=1 // pred_fallthru
      _
    // Predicated region
    $region106: #{tpu_custom_call.1} parent=1 // pred_check
      _
    $region107: #{tpu_custom_call.1} parent=1 // pred_check_branch
      %225 = sbr.rel (0) target = $region109
    $region108: #{tpu_custom_call.1} parent=1 // pred_region
      %227 = dma.done [#allocation9], 2048
    $region109: #{tpu_custom_call.1} parent=1 // pred_fallthru
      _
    // Predicated region
    $region110: #{tpu_custom_call.1} parent=1 // pred_check
      _
    $region111: #{tpu_custom_call.1} parent=1 // pred_check_branch
      %229 = sbr.rel (0) target = $region113
    $region112: #{tpu_custom_call.1} parent=1 // pred_region
      %231 = dma.done [#allocation12], 16
    $region113: #{tpu_custom_call.1} parent=1 // pred_fallthru
      _
    // Predicated region
    $region114: #{tpu_custom_call.1} parent=1 // pred_check
      _
    $region115: #{tpu_custom_call.1} parent=1 // pred_check_branch
      %233 = sbr.rel (0) target = $region117
    $region116: #{tpu_custom_call.1} parent=1 // pred_region
      %235 = dma.done [#allocation12], 16
    $region117: #{tpu_custom_call.1} parent=1 // pred_fallthru
      _
    // Predicated region
    $region118: #{tpu_custom_call.1} parent=1 // pred_check
      _
    $region119: #{tpu_custom_call.1} parent=1 // pred_check_branch
      %237 = sbr.rel (0) target = $region121
    $region120: #{tpu_custom_call.1} parent=1 // pred_region
      %239 = dma.done [#allocation15], 16
    $region121: #{tpu_custom_call.1} parent=1 // pred_fallthru
      _
    // Predicated region
    $region122: #{tpu_custom_call.1} parent=1 // pred_check
      _
    $region123: #{tpu_custom_call.1} parent=1 // pred_check_branch
      %241 = sbr.rel (0) target = $region125
    $region124: #{tpu_custom_call.1} parent=1 // pred_region
      %243 = dma.done [#allocation15], 16
    $region125: #{tpu_custom_call.1} parent=1 // pred_fallthru
      _
    // Predicated region
    $region126: #{tpu_custom_call.1} parent=1 // pred_check
      _
    $region127: #{tpu_custom_call.1} parent=1 // pred_check_branch
      %245 = sbr.rel (0) target = $region129
    $region128: #{tpu_custom_call.1} parent=1 // pred_region
      %247 = dma.done [#allocation18], 256
    $region129: #{tpu_custom_call.1} parent=1 // pred_fallthru
      _
    // Predicated region
    $region130: #{tpu_custom_call.1} parent=1 // pred_check
      _
    $region131: #{tpu_custom_call.1} parent=1 // pred_check_branch
      %249 = sbr.rel (0) target = $region133
    $region132: #{tpu_custom_call.1} parent=1 // pred_region
      %251 = dma.done [#allocation18], 512
    $region133: #{tpu_custom_call.1} parent=1 // pred_fallthru
      _
    // Predicated region
    $region134: #{tpu_custom_call.1} parent=1 // pred_check
      _
    $region135: #{tpu_custom_call.1} parent=1 // pred_check_branch
      %253 = sbr.rel (0) target = $region137
    $region136: #{tpu_custom_call.1} parent=1 // pred_region
      %255 = dma.done [#allocation21], 512
    $region137: #{tpu_custom_call.1} parent=1 // pred_fallthru
      _
    // Predicated region
    $region138: #{tpu_custom_call.1} parent=1 // pred_check
      _
    $region139: #{tpu_custom_call.1} parent=1 // pred_check_branch
      %257 = sbr.rel (0) target = $region141
    $region140: #{tpu_custom_call.1} parent=1 // pred_region
      %259 = dma.done [#allocation21], 1024
    $region141: #{tpu_custom_call.1} parent=1 // pred_fallthru
      _
    %v260 = vld [vmem:[#allocation2] sm:$0x3]
    %v261 = vld [vmem:[%s1] sm:$0xff]
    %v262 = vld [vmem:[%s1 + $0x8] sm:$0xff]
    %v263 = vld [vmem:[%s1 + $0x10] sm:$0xff]
    %v264 = vld [vmem:[%s1 + $0x18] sm:$0xff]
    %v265 = vld [vmem:[%s1 + $0x20] sm:$0xff]
    %v266 = vld [vmem:[%s1 + $0x28] sm:$0xff]
    %v267 = vld [vmem:[%s1 + $0x30] sm:$0xff]
    %v268 = vld [vmem:[%s1 + $0x38] sm:$0xff]
    %v269 = vld [vmem:[%s1 + $0x40] sm:$0xff]
    %v270 = vld [vmem:[%s1 + $0x48] sm:$0xff]
    %v271 = vld [vmem:[%s1 + $0x50] sm:$0xff]
    %v272 = vld [vmem:[%s1 + $0x58] sm:$0xff]
    %v273 = vld [vmem:[%s1 + $0x60] sm:$0xff]
    %v274 = vld [vmem:[%s1 + $0x68] sm:$0xff]
    %v275 = vld [vmem:[%s1 + $0x70] sm:$0xff]
    %v276 = vld [vmem:[%s1 + $0x78] sm:$0xff]
    %v277 = vld [vmem:[#allocation5] sm:$0xf]
    %v279 = vperm.slane %v277, 0
    %v280 = vperm.slane %v277, 1
    %v281 = vperm.slane %v277, 2
    %v282 = vperm.slane %v277, 3
    %vm287 = vcmask 261120
    %v289 = vsel %vm287, %v260, 0
    %291 = vmatpush.msra.mxu0 0.0
    %292 = vmatpush.msra.mxu0 0.0
    %293 = vmatpush.msra.mxu0 0.0
    %294 = vmatpush.msra.mxu0 0.0
    %295 = vmatpush.msra.mxu0 0.0
    %296 = vmatpush.msra.mxu0 0.0
    %297 = vmatpush.msra.mxu0 0.0
    %298 = vmatpush.msra.mxu0 0.0
    %299 = vmatpush.msra.mxu0 0.0
    %300 = vmatpush.msra.mxu0 0.0
    %301 = vmatpush.msra.mxu0 0.0
    %302 = vmatpush.msra.mxu0 0.0
    %303 = vmatpush.msra.mxu0 %v273
    %304 = vmatpush.msra.mxu0 %v269
    %305 = vmatpush.msra.mxu0 %v265
    %306 = vmatpush.msra.mxu0 %v261
    %307 = vmatmul.f32.gmra.mxu0 %v289
    %v308 = vpop.f32.mrf.mxu0
    %v309 = vadd.f32 %v279, %v308
    %310 = vdwg.mxu0
    %311 = vmatpush.msra.mxu0 0.0
    %312 = vmatpush.msra.mxu0 0.0
    %313 = vmatpush.msra.mxu0 0.0
    %314 = vmatpush.msra.mxu0 0.0
    %315 = vmatpush.msra.mxu0 0.0
    %316 = vmatpush.msra.mxu0 0.0
    %317 = vmatpush.msra.mxu0 0.0
    %318 = vmatpush.msra.mxu0 0.0
    %319 = vmatpush.msra.mxu0 0.0
    %320 = vmatpush.msra.mxu0 0.0
    %321 = vmatpush.msra.mxu0 0.0
    %322 = vmatpush.msra.mxu0 0.0
    %323 = vmatpush.msra.mxu0 %v274
    %324 = vmatpush.msra.mxu0 %v270
    %325 = vmatpush.msra.mxu0 %v266
    %326 = vmatpush.msra.mxu0 %v262
    %327 = vmatmul.f32.gmra.mxu0 %v289
    %v328 = vpop.f32.mrf.mxu0
    %v329 = vadd.f32 %v280, %v328
    %330 = vdwg.mxu0
    %331 = vmatpush.msra.mxu0 0.0
    %332 = vmatpush.msra.mxu0 0.0
    %333 = vmatpush.msra.mxu0 0.0
    %334 = vmatpush.msra.mxu0 0.0
    %335 = vmatpush.msra.mxu0 0.0
    %336 = vmatpush.msra.mxu0 0.0
    %337 = vmatpush.msra.mxu0 0.0
    %338 = vmatpush.msra.mxu0 0.0
    %339 = vmatpush.msra.mxu0 0.0
    %340 = vmatpush.msra.mxu0 0.0
    %341 = vmatpush.msra.mxu0 0.0
    %342 = vmatpush.msra.mxu0 0.0
    %343 = vmatpush.msra.mxu0 %v275
    %344 = vmatpush.msra.mxu0 %v271
    %345 = vmatpush.msra.mxu0 %v267
    %346 = vmatpush.msra.mxu0 %v263
    %347 = vmatmul.f32.gmra.mxu0 %v289
    %v348 = vpop.f32.mrf.mxu0
    %v349 = vadd.f32 %v281, %v348
    %350 = vdwg.mxu0
    %351 = vmatpush.msra.mxu0 0.0
    %352 = vmatpush.msra.mxu0 0.0
    %353 = vmatpush.msra.mxu0 0.0
    %354 = vmatpush.msra.mxu0 0.0
    %355 = vmatpush.msra.mxu0 0.0
    %356 = vmatpush.msra.mxu0 0.0
    %357 = vmatpush.msra.mxu0 0.0
    %358 = vmatpush.msra.mxu0 0.0
    %359 = vmatpush.msra.mxu0 0.0
    %360 = vmatpush.msra.mxu0 0.0
    %361 = vmatpush.msra.mxu0 0.0
    %362 = vmatpush.msra.mxu0 0.0
    %363 = vmatpush.msra.mxu0 %v276
    %364 = vmatpush.msra.mxu0 %v272
    %365 = vmatpush.msra.mxu0 %v268
    %366 = vmatpush.msra.mxu0 %v264
    %367 = vmatmul.f32.gmra.mxu0 %v289
    %v368 = vpop.f32.mrf.mxu0
    %v369 = vadd.f32 %v282, %v368
    %370 = vdwg.mxu0
    %v371 = vld [vmem:[%s3] sm:$0xff]
    %v372 = vld [vmem:[%s3 + $0x8] sm:$0xff]
    %vm373 = vcmask 15360
    %v375 = vsel %vm373, %v371, 0
    %v378 = vsel %vm373, %v372, 0
    %vm380 = vcmask 1041408
    %v382 = vsel %vm380, %v309, 0
    %v385 = vsel %vm380, %v329, 0
    %v388 = vsel %vm380, %v349, 0
    %v391 = vsel %vm380, %v369, 0
    %393 = vmatpush.msra.mxu0 0.0
    %394 = vmatpush.msra.mxu0 0.0
    %395 = vmatpush.msra.mxu0 0.0
    %396 = vmatpush.msra.mxu0 0.0
    %397 = vmatpush.msra.mxu0 0.0
    %398 = vmatpush.msra.mxu0 0.0
    %399 = vmatpush.msra.mxu0 0.0
    %400 = vmatpush.msra.mxu0 0.0
    %401 = vmatpush.msra.mxu0 0.0
    %402 = vmatpush.msra.mxu0 0.0
    %403 = vmatpush.msra.mxu0 0.0
    %404 = vmatpush.msra.mxu0 0.0
    %405 = vmatpush.msra.mxu0 0.0
    %406 = vmatpush.msra.mxu0 0.0
    %407 = vmatpush.msra.mxu0 0.0
    %408 = vmatpush.msra.mxu0 %v382
    %409 = vmatmul.f32.gmra.mxu0 %v375
    %v410 = vpop.f32.mrf.mxu0
    %v411 = vadd.f32 0.0, %v410
    %412 = vmatmul.f32.gmra.mxu0 %v378
    %v413 = vpop.f32.mrf.mxu0
    %v414 = vadd.f32 0.0, %v413
    %415 = vdwg.mxu0
    %416 = vmatpush.msra.mxu0 0.0
    %417 = vmatpush.msra.mxu0 0.0
    %418 = vmatpush.msra.mxu0 0.0
    %419 = vmatpush.msra.mxu0 0.0
    %420 = vmatpush.msra.mxu0 0.0
    %421 = vmatpush.msra.mxu0 0.0
    %422 = vmatpush.msra.mxu0 0.0
    %423 = vmatpush.msra.mxu0 0.0
    %424 = vmatpush.msra.mxu0 0.0
    %425 = vmatpush.msra.mxu0 0.0
    %426 = vmatpush.msra.mxu0 0.0
    %427 = vmatpush.msra.mxu0 0.0
    %428 = vmatpush.msra.mxu0 0.0
    %429 = vmatpush.msra.mxu0 0.0
    %430 = vmatpush.msra.mxu0 0.0
    %431 = vmatpush.msra.mxu0 %v385
    %432 = vmatmul.f32.gmra.mxu0 %v375
    %v433 = vpop.f32.mrf.mxu0
    %v434 = vadd.f32 0.0, %v433
    %435 = vmatmul.f32.gmra.mxu0 %v378
    %v436 = vpop.f32.mrf.mxu0
    %v437 = vadd.f32 0.0, %v436
    %438 = vdwg.mxu0
    %439 = vmatpush.msra.mxu0 0.0
    %440 = vmatpush.msra.mxu0 0.0
    %441 = vmatpush.msra.mxu0 0.0
    %442 = vmatpush.msra.mxu0 0.0
    %443 = vmatpush.msra.mxu0 0.0
    %444 = vmatpush.msra.mxu0 0.0
    %445 = vmatpush.msra.mxu0 0.0
    %446 = vmatpush.msra.mxu0 0.0
    %447 = vmatpush.msra.mxu0 0.0
    %448 = vmatpush.msra.mxu0 0.0
    %449 = vmatpush.msra.mxu0 0.0
    %450 = vmatpush.msra.mxu0 0.0
    %451 = vmatpush.msra.mxu0 0.0
    %452 = vmatpush.msra.mxu0 0.0
    %453 = vmatpush.msra.mxu0 0.0
    %454 = vmatpush.msra.mxu0 %v388
    %455 = vmatmul.f32.gmra.mxu0 %v375
    %v456 = vpop.f32.mrf.mxu0
    %v457 = vadd.f32 0.0, %v456
    %458 = vmatmul.f32.gmra.mxu0 %v378
    %v459 = vpop.f32.mrf.mxu0
    %v460 = vadd.f32 0.0, %v459
    %461 = vdwg.mxu0
    %462 = vmatpush.msra.mxu0 0.0
    %463 = vmatpush.msra.mxu0 0.0
    %464 = vmatpush.msra.mxu0 0.0
    %465 = vmatpush.msra.mxu0 0.0
    %466 = vmatpush.msra.mxu0 0.0
    %467 = vmatpush.msra.mxu0 0.0
    %468 = vmatpush.msra.mxu0 0.0
    %469 = vmatpush.msra.mxu0 0.0
    %470 = vmatpush.msra.mxu0 0.0
    %471 = vmatpush.msra.mxu0 0.0
    %472 = vmatpush.msra.mxu0 0.0
    %473 = vmatpush.msra.mxu0 0.0
    %474 = vmatpush.msra.mxu0 0.0
    %475 = vmatpush.msra.mxu0 0.0
    %476 = vmatpush.msra.mxu0 0.0
    %477 = vmatpush.msra.mxu0 %v391
    %478 = vmatmul.f32.gmra.mxu0 %v375
    %v479 = vpop.f32.mrf.mxu0
    %v480 = vadd.f32 0.0, %v479
    %481 = vmatmul.f32.gmra.mxu0 %v378
    %v482 = vpop.f32.mrf.mxu0
    %v483 = vadd.f32 0.0, %v482
    %484 = vdwg.mxu0
    %v485 = vld [vmem:[%s4] sm:$0xff]
    %v486 = vld [vmem:[%s4 + $0x8] sm:$0xff]
    %v487 = vld [vmem:[%s4 + $0x10] sm:$0xff]
    %v488 = vld [vmem:[%s4 + $0x18] sm:$0xff]
    %v489 = vld [vmem:[%s4 + $0x20] sm:$0xff]
    %v490 = vld [vmem:[%s4 + $0x28] sm:$0xff]
    %v491 = vld [vmem:[%s4 + $0x30] sm:$0xff]
    %v492 = vld [vmem:[%s4 + $0x38] sm:$0xff]
    %v493 = vmul.f32 %v411, %v485
    %v494 = vmul.f32 %v434, %v486
    %v495 = vmul.f32 %v457, %v487
    %v496 = vmul.f32 %v480, %v488
    %v497 = vmul.f32 %v414, %v489
    %v498 = vmul.f32 %v437, %v490
    %v499 = vmul.f32 %v460, %v491
    %v500 = vmul.f32 %v483, %v492
    %v501 = vld [vmem:[%s5] sm:$0xff]
    %v502 = vld [vmem:[%s5 + $0x8] sm:$0xff]
    %v503 = vld [vmem:[%s5 + $0x10] sm:$0xff]
    %v504 = vld [vmem:[%s5 + $0x18] sm:$0xff]
    %v505 = vld [vmem:[%s5 + $0x20] sm:$0xff]
    %v506 = vld [vmem:[%s5 + $0x28] sm:$0xff]
    %v507 = vld [vmem:[%s5 + $0x30] sm:$0xff]
    %v508 = vld [vmem:[%s5 + $0x38] sm:$0xff]
    %v509 = vld [vmem:[%s5 + $0x40] sm:$0xff]
    %v510 = vld [vmem:[%s5 + $0x48] sm:$0xff]
    %v511 = vld [vmem:[%s5 + $0x50] sm:$0xff]
    %v512 = vld [vmem:[%s5 + $0x58] sm:$0xff]
    %v513 = vld [vmem:[%s5 + $0x60] sm:$0xff]
    %v514 = vld [vmem:[%s5 + $0x68] sm:$0xff]
    %v515 = vld [vmem:[%s5 + $0x70] sm:$0xff]
    %v516 = vld [vmem:[%s5 + $0x78] sm:$0xff]
    %v517 = vld [vmem:[%s5 + $0x80] sm:$0xff]
    %v518 = vld [vmem:[%s5 + $0x88] sm:$0xff]
    %v519 = vld [vmem:[%s5 + $0x90] sm:$0xff]
    %v520 = vld [vmem:[%s5 + $0x98] sm:$0xff]
    %v521 = vld [vmem:[%s5 + $0xa0] sm:$0xff]
    %v522 = vld [vmem:[%s5 + $0xa8] sm:$0xff]
    %v523 = vld [vmem:[%s5 + $0xb0] sm:$0xff]
    %v524 = vld [vmem:[%s5 + $0xb8] sm:$0xff]
    %v525 = vld [vmem:[%s5 + $0xc0] sm:$0xff]
    %v526 = vld [vmem:[%s5 + $0xc8] sm:$0xff]
    %v527 = vld [vmem:[%s5 + $0xd0] sm:$0xff]
    %v528 = vld [vmem:[%s5 + $0xd8] sm:$0xff]
    %v529 = vld [vmem:[%s5 + $0xe0] sm:$0xff]
    %v530 = vld [vmem:[%s5 + $0xe8] sm:$0xff]
    %v531 = vld [vmem:[%s5 + $0xf0] sm:$0xff]
    %v532 = vld [vmem:[%s5 + $0xf8] sm:$0xff]
    %v533 = vld [vmem:[%s5 + $0x100] sm:$0xff]
    %v534 = vld [vmem:[%s5 + $0x108] sm:$0xff]
    %v535 = vld [vmem:[%s5 + $0x110] sm:$0xff]
    %v536 = vld [vmem:[%s5 + $0x118] sm:$0xff]
    %v537 = vld [vmem:[%s5 + $0x120] sm:$0xff]
    %v538 = vld [vmem:[%s5 + $0x128] sm:$0xff]
    %v539 = vld [vmem:[%s5 + $0x130] sm:$0xff]
    %v540 = vld [vmem:[%s5 + $0x138] sm:$0xff]
    %v541 = vld [vmem:[%s5 + $0x140] sm:$0xff]
    %v542 = vld [vmem:[%s5 + $0x148] sm:$0xff]
    %v543 = vld [vmem:[%s5 + $0x150] sm:$0xff]
    %v544 = vld [vmem:[%s5 + $0x158] sm:$0xff]
    %v545 = vld [vmem:[%s5 + $0x160] sm:$0xff]
    %v546 = vld [vmem:[%s5 + $0x168] sm:$0xff]
    %v547 = vld [vmem:[%s5 + $0x170] sm:$0xff]
    %v548 = vld [vmem:[%s5 + $0x178] sm:$0xff]
    %v549 = vld [vmem:[%s5 + $0x180] sm:$0xff]
    %v550 = vld [vmem:[%s5 + $0x188] sm:$0xff]
    %v551 = vld [vmem:[%s5 + $0x190] sm:$0xff]
    %v552 = vld [vmem:[%s5 + $0x198] sm:$0xff]
    %v553 = vld [vmem:[%s5 + $0x1a0] sm:$0xff]
    %v554 = vld [vmem:[%s5 + $0x1a8] sm:$0xff]
    %v555 = vld [vmem:[%s5 + $0x1b0] sm:$0xff]
    %v556 = vld [vmem:[%s5 + $0x1b8] sm:$0xff]
    %v557 = vld [vmem:[%s5 + $0x1c0] sm:$0xff]
    %v558 = vld [vmem:[%s5 + $0x1c8] sm:$0xff]
    %v559 = vld [vmem:[%s5 + $0x1d0] sm:$0xff]
    %v560 = vld [vmem:[%s5 + $0x1d8] sm:$0xff]
    %v561 = vld [vmem:[%s5 + $0x1e0] sm:$0xff]
    %v562 = vld [vmem:[%s5 + $0x1e8] sm:$0xff]
    %v563 = vld [vmem:[%s5 + $0x1f0] sm:$0xff]
    %v564 = vld [vmem:[%s5 + $0x1f8] sm:$0xff]
    %565 = vmatpush.msra.mxu0 %v516
    %566 = vmatpush.msra.mxu0 %v515
    %567 = vmatpush.msra.mxu0 %v514
    %568 = vmatpush.msra.mxu0 %v513
    %569 = vmatpush.msra.mxu0 %v512
    %570 = vmatpush.msra.mxu0 %v511
    %571 = vmatpush.msra.mxu0 %v510
    %572 = vmatpush.msra.mxu0 %v509
    %573 = vmatpush.msra.mxu0 %v508
    %574 = vmatpush.msra.mxu0 %v507
    %575 = vmatpush.msra.mxu0 %v506
    %576 = vmatpush.msra.mxu0 %v505
    %577 = vmatpush.msra.mxu0 %v504
    %578 = vmatpush.msra.mxu0 %v503
    %579 = vmatpush.msra.mxu0 %v502
    %580 = vmatpush.msra.mxu0 %v501
    %581 = vmatmul.f32.gmra.mxu0 %v493
    %v582 = vpop.f32.mrf.mxu0
    %v583 = vadd.f32 0.0, %v582
    %584 = vmatmul.f32.gmra.mxu0 %v497
    %v585 = vpop.f32.mrf.mxu0
    %v586 = vadd.f32 0.0, %v585
    %587 = vdwg.mxu0
    %588 = vmatpush.msra.mxu0 %v532
    %589 = vmatpush.msra.mxu0 %v531
    %590 = vmatpush.msra.mxu0 %v530
    %591 = vmatpush.msra.mxu0 %v529
    %592 = vmatpush.msra.mxu0 %v528
    %593 = vmatpush.msra.mxu0 %v527
    %594 = vmatpush.msra.mxu0 %v526
    %595 = vmatpush.msra.mxu0 %v525
    %596 = vmatpush.msra.mxu0 %v524
    %597 = vmatpush.msra.mxu0 %v523
    %598 = vmatpush.msra.mxu0 %v522
    %599 = vmatpush.msra.mxu0 %v521
    %600 = vmatpush.msra.mxu0 %v520
    %601 = vmatpush.msra.mxu0 %v519
    %602 = vmatpush.msra.mxu0 %v518
    %603 = vmatpush.msra.mxu0 %v517
    %604 = vmatmul.f32.gmra.mxu0 %v494
    %v605 = vpop.f32.mrf.mxu0
    %v606 = vadd.f32 %v583, %v605
    %607 = vmatmul.f32.gmra.mxu0 %v498
    %v608 = vpop.f32.mrf.mxu0
    %v609 = vadd.f32 %v586, %v608
    %610 = vdwg.mxu0
    %611 = vmatpush.msra.mxu0 %v548
    %612 = vmatpush.msra.mxu0 %v547
    %613 = vmatpush.msra.mxu0 %v546
    %614 = vmatpush.msra.mxu0 %v545
    %615 = vmatpush.msra.mxu0 %v544
    %616 = vmatpush.msra.mxu0 %v543
    %617 = vmatpush.msra.mxu0 %v542
    %618 = vmatpush.msra.mxu0 %v541
    %619 = vmatpush.msra.mxu0 %v540
    %620 = vmatpush.msra.mxu0 %v539
    %621 = vmatpush.msra.mxu0 %v538
    %622 = vmatpush.msra.mxu0 %v537
    %623 = vmatpush.msra.mxu0 %v536
    %624 = vmatpush.msra.mxu0 %v535
    %625 = vmatpush.msra.mxu0 %v534
    %626 = vmatpush.msra.mxu0 %v533
    %627 = vmatmul.f32.gmra.mxu0 %v495
    %v628 = vpop.f32.mrf.mxu0
    %v629 = vadd.f32 %v606, %v628
    %630 = vmatmul.f32.gmra.mxu0 %v499
    %v631 = vpop.f32.mrf.mxu0
    %v632 = vadd.f32 %v609, %v631
    %633 = vdwg.mxu0
    %634 = vmatpush.msra.mxu0 %v564
    %635 = vmatpush.msra.mxu0 %v563
    %636 = vmatpush.msra.mxu0 %v562
    %637 = vmatpush.msra.mxu0 %v561
    %638 = vmatpush.msra.mxu0 %v560
    %639 = vmatpush.msra.mxu0 %v559
    %640 = vmatpush.msra.mxu0 %v558
    %641 = vmatpush.msra.mxu0 %v557
    %642 = vmatpush.msra.mxu0 %v556
    %643 = vmatpush.msra.mxu0 %v555
    %644 = vmatpush.msra.mxu0 %v554
    %645 = vmatpush.msra.mxu0 %v553
    %646 = vmatpush.msra.mxu0 %v552
    %647 = vmatpush.msra.mxu0 %v551
    %648 = vmatpush.msra.mxu0 %v550
    %649 = vmatpush.msra.mxu0 %v549
    %650 = vmatmul.f32.gmra.mxu0 %v496
    %v651 = vpop.f32.mrf.mxu0
    %v652 = vadd.f32 %v629, %v651
    %653 = vmatmul.f32.gmra.mxu0 %v500
    %v654 = vpop.f32.mrf.mxu0
    %v655 = vadd.f32 %v632, %v654
    %656 = vdwg.mxu0
    %v657 = vld [vmem:[#allocation7] sm:$0xff]
    %v658 = vld [vmem:[#allocation7 + $0x8] sm:$0xff]
    %v659 = vld [vmem:[#allocation7 + $0x10] sm:$0xff]
    %v660 = vld [vmem:[#allocation7 + $0x18] sm:$0xff]
    %v661 = vld [vmem:[#allocation7 + $0x20] sm:$0xff]
    %v662 = vld [vmem:[#allocation7 + $0x28] sm:$0xff]
    %v663 = vld [vmem:[#allocation7 + $0x30] sm:$0xff]
    %v664 = vld [vmem:[#allocation7 + $0x38] sm:$0xff]
    %v665 = vld [vmem:[#allocation7 + $0x40] sm:$0xff]
    %v666 = vld [vmem:[#allocation7 + $0x48] sm:$0xff]
    %v667 = vld [vmem:[#allocation7 + $0x50] sm:$0xff]
    %v668 = vld [vmem:[#allocation7 + $0x58] sm:$0xff]
    %v669 = vld [vmem:[#allocation7 + $0x60] sm:$0xff]
    %v670 = vld [vmem:[#allocation7 + $0x68] sm:$0xff]
    %v671 = vld [vmem:[#allocation7 + $0x70] sm:$0xff]
    %v672 = vld [vmem:[#allocation7 + $0x78] sm:$0xff]
    %vm673 = vcmask 523264
    %v675 = vsel %vm673, %v652, 0
    %v678 = vsel %vm673, %v655, 0
    %680 = vmatpush.msra.mxu0 0.0
    %681 = vmatpush.msra.mxu0 0.0
    %682 = vmatpush.msra.mxu0 0.0
    %683 = vmatpush.msra.mxu0 0.0
    %684 = vmatpush.msra.mxu0 0.0
    %685 = vmatpush.msra.mxu0 0.0
    %686 = vmatpush.msra.mxu0 0.0
    %687 = vmatpush.msra.mxu0 0.0
    %688 = vmatpush.msra.mxu0 %v671
    %689 = vmatpush.msra.mxu0 %v669
    %690 = vmatpush.msra.mxu0 %v667
    %691 = vmatpush.msra.mxu0 %v665
    %692 = vmatpush.msra.mxu0 %v663
    %693 = vmatpush.msra.mxu0 %v661
    %694 = vmatpush.msra.mxu0 %v659
    %695 = vmatpush.msra.mxu0 %v657
    %696 = vmatmul.f32.gmra.mxu0 %v675
    %v697 = vpop.f32.mrf.mxu0
    %v698 = vadd.f32 0.0, %v697
    %699 = vmatmul.f32.gmra.mxu0 %v678
    %v700 = vpop.f32.mrf.mxu0
    %v701 = vadd.f32 0.0, %v700
    %702 = vdwg.mxu0
    %703 = vmatpush.msra.mxu0 0.0
    %704 = vmatpush.msra.mxu0 0.0
    %705 = vmatpush.msra.mxu0 0.0
    %706 = vmatpush.msra.mxu0 0.0
    %707 = vmatpush.msra.mxu0 0.0
    %708 = vmatpush.msra.mxu0 0.0
    %709 = vmatpush.msra.mxu0 0.0
    %710 = vmatpush.msra.mxu0 0.0
    %711 = vmatpush.msra.mxu0 %v672
    %712 = vmatpush.msra.mxu0 %v670
    %713 = vmatpush.msra.mxu0 %v668
    %714 = vmatpush.msra.mxu0 %v666
    %715 = vmatpush.msra.mxu0 %v664
    %716 = vmatpush.msra.mxu0 %v662
    %717 = vmatpush.msra.mxu0 %v660
    %718 = vmatpush.msra.mxu0 %v658
    %719 = vmatmul.f32.gmra.mxu0 %v675
    %v720 = vpop.f32.mrf.mxu0
    %v721 = vadd.f32 0.0, %v720
    %722 = vmatmul.f32.gmra.mxu0 %v678
    %v723 = vpop.f32.mrf.mxu0
    %v724 = vadd.f32 0.0, %v723
    %725 = vdwg.mxu0
    %v726 = vld [vmem:[#allocation17] sm:$0xff]
    %v727 = vld [vmem:[#allocation17 + $0x8] sm:$0xff]
    %730 = vrot.lane.b32.xlu0 %v698, 64
    %v731 = vpop.permute.xlu0 %730
    %732 = vrot.lane.b32.xlu0 %v701, 64
    %v733 = vpop.permute.xlu0 %732
    %vm736 = vcmask 130048
    %v738 = vsel %vm736, %v726, 0
    %v741 = vsel %vm736, %v727, 0
    %743 = vmatpush.msra.mxu0 0.0
    %744 = vmatpush.msra.mxu0 0.0
    %745 = vmatpush.msra.mxu0 0.0
    %746 = vmatpush.msra.mxu0 0.0
    %747 = vmatpush.msra.mxu0 0.0
    %748 = vmatpush.msra.mxu0 0.0
    %749 = vmatpush.msra.mxu0 0.0
    %750 = vmatpush.msra.mxu0 0.0
    %751 = vmatpush.msra.mxu0 0.0
    %752 = vmatpush.msra.mxu0 0.0
    %753 = vmatpush.msra.mxu0 0.0
    %754 = vmatpush.msra.mxu0 0.0
    %755 = vmatpush.msra.mxu0 0.0
    %756 = vmatpush.msra.mxu0 0.0
    %757 = vmatpush.msra.mxu0 %v701
    %758 = vmatpush.msra.mxu0 %v698
    %759 = vmatmul.f32.gmra.mxu0 %v738
    %v760 = vpop.f32.mrf.mxu0
    %v761 = vadd.f32 %v731, %v760
    %762 = vmatmul.f32.gmra.mxu0 %v741
    %v763 = vpop.f32.mrf.mxu0
    %v764 = vadd.f32 %v733, %v763
    %765 = vdwg.mxu0
    %v766 = vld [vmem:[%s16] sm:$0xff]
    %v767 = vld [vmem:[%s16 + $0x8] sm:$0xff]
    %v769 = vsel %vm736, %v766, 0
    %v772 = vsel %vm736, %v767, 0
    %774 = vmatpush.msra.mxu0 0.0
    %775 = vmatpush.msra.mxu0 0.0
    %776 = vmatpush.msra.mxu0 0.0
    %777 = vmatpush.msra.mxu0 0.0
    %778 = vmatpush.msra.mxu0 0.0
    %779 = vmatpush.msra.mxu0 0.0
    %780 = vmatpush.msra.mxu0 0.0
    %781 = vmatpush.msra.mxu0 0.0
    %782 = vmatpush.msra.mxu0 0.0
    %783 = vmatpush.msra.mxu0 0.0
    %784 = vmatpush.msra.mxu0 0.0
    %785 = vmatpush.msra.mxu0 0.0
    %786 = vmatpush.msra.mxu0 0.0
    %787 = vmatpush.msra.mxu0 0.0
    %788 = vmatpush.msra.mxu0 %v724
    %789 = vmatpush.msra.mxu0 %v721
    %790 = vmatmul.f32.gmra.mxu0 %v769
    %v791 = vpop.f32.mrf.mxu0
    %v792 = vadd.f32 0.0, %v791
    %793 = vmatmul.f32.gmra.mxu0 %v772
    %v794 = vpop.f32.mrf.mxu0
    %v795 = vadd.f32 0.0, %v794
    %796 = vdwg.mxu0
    %v797 = vadd.f32 %v761, %v792
    %v798 = vadd.f32 %v764, %v795
    %v799 = vld [vmem:[#allocation8] sm:$0x1]
    %v801 = vperm.slane %v799, 0
    %v803 = vadd.f32 %v797, %v801
    %v804 = vadd.f32 %v798, %v801
    %vm805 = vcmp.gt.f32.partialorder %v803, 0.0
    %vm806 = vcmp.gt.f32.partialorder %v804, 0.0
    %v807 = vmin.f32 %v803, 0.0
    %v808 = vmin.f32 %v804, 0.0
    %v809 = vmul.f32 %v807, 1.442695
    %v810 = vpow.pop %v809
    %v811 = vmul.f32 %v808, 1.442695
    %v812 = vpow.pop %v811
    %v813 = vsub.f32 %v810, 1.0
    %v814 = vsub.f32 %v812, 1.0
    %v815 = vsel %vm805, %v803, %v813
    %v816 = vsel %vm806, %v804, %v814
    %v817 = vld [vmem:[#allocation10] sm:$0xff]
    %v818 = vld [vmem:[#allocation10 + $0x8] sm:$0xff]
    %v819 = vld [vmem:[#allocation10 + $0x10] sm:$0xff]
    %v820 = vld [vmem:[#allocation10 + $0x18] sm:$0xff]
    %v821 = vld [vmem:[#allocation10 + $0x20] sm:$0xff]
    %v822 = vld [vmem:[#allocation10 + $0x28] sm:$0xff]
    %v823 = vld [vmem:[#allocation10 + $0x30] sm:$0xff]
    %v824 = vld [vmem:[#allocation10 + $0x38] sm:$0xff]
    %v825 = vld [vmem:[#allocation10 + $0x40] sm:$0xff]
    %v826 = vld [vmem:[#allocation10 + $0x48] sm:$0xff]
    %v827 = vld [vmem:[#allocation10 + $0x50] sm:$0xff]
    %v828 = vld [vmem:[#allocation10 + $0x58] sm:$0xff]
    %v829 = vld [vmem:[#allocation10 + $0x60] sm:$0xff]
    %v830 = vld [vmem:[#allocation10 + $0x68] sm:$0xff]
    %v831 = vld [vmem:[#allocation10 + $0x70] sm:$0xff]
    %v832 = vld [vmem:[#allocation10 + $0x78] sm:$0xff]
    %v834 = vsel %vm673, %v815, 0
    %v837 = vsel %vm673, %v816, 0
    %839 = vmatpush.msra.mxu0 0.0
    %840 = vmatpush.msra.mxu0 0.0
    %841 = vmatpush.msra.mxu0 0.0
    %842 = vmatpush.msra.mxu0 0.0
    %843 = vmatpush.msra.mxu0 0.0
    %844 = vmatpush.msra.mxu0 0.0
    %845 = vmatpush.msra.mxu0 0.0
    %846 = vmatpush.msra.mxu0 0.0
    %847 = vmatpush.msra.mxu0 %v831
    %848 = vmatpush.msra.mxu0 %v829
    %849 = vmatpush.msra.mxu0 %v827
    %850 = vmatpush.msra.mxu0 %v825
    %851 = vmatpush.msra.mxu0 %v823
    %852 = vmatpush.msra.mxu0 %v821
    %853 = vmatpush.msra.mxu0 %v819
    %854 = vmatpush.msra.mxu0 %v817
    %855 = vmatmul.f32.gmra.mxu0 %v834
    %v856 = vpop.f32.mrf.mxu0
    %v857 = vadd.f32 0.0, %v856
    %858 = vmatmul.f32.gmra.mxu0 %v837
    %v859 = vpop.f32.mrf.mxu0
    %v860 = vadd.f32 0.0, %v859
    %861 = vdwg.mxu0
    %862 = vmatpush.msra.mxu0 0.0
    %863 = vmatpush.msra.mxu0 0.0
    %864 = vmatpush.msra.mxu0 0.0
    %865 = vmatpush.msra.mxu0 0.0
    %866 = vmatpush.msra.mxu0 0.0
    %867 = vmatpush.msra.mxu0 0.0
    %868 = vmatpush.msra.mxu0 0.0
    %869 = vmatpush.msra.mxu0 0.0
    %870 = vmatpush.msra.mxu0 %v832
    %871 = vmatpush.msra.mxu0 %v830
    %872 = vmatpush.msra.mxu0 %v828
    %873 = vmatpush.msra.mxu0 %v826
    %874 = vmatpush.msra.mxu0 %v824
    %875 = vmatpush.msra.mxu0 %v822
    %876 = vmatpush.msra.mxu0 %v820
    %877 = vmatpush.msra.mxu0 %v818
    %878 = vmatmul.f32.gmra.mxu0 %v834
    %v879 = vpop.f32.mrf.mxu0
    %v880 = vadd.f32 0.0, %v879
    %881 = vmatmul.f32.gmra.mxu0 %v837
    %v882 = vpop.f32.mrf.mxu0
    %v883 = vadd.f32 0.0, %v882
    %884 = vdwg.mxu0
    %887 = vrot.lane.b32.xlu0 %v857, 64
    %v888 = vpop.permute.xlu0 %887
    %889 = vrot.lane.b32.xlu0 %v860, 64
    %v890 = vpop.permute.xlu0 %889
    %893 = vmatpush.msra.mxu0 0.0
    %894 = vmatpush.msra.mxu0 0.0
    %895 = vmatpush.msra.mxu0 0.0
    %896 = vmatpush.msra.mxu0 0.0
    %897 = vmatpush.msra.mxu0 0.0
    %898 = vmatpush.msra.mxu0 0.0
    %899 = vmatpush.msra.mxu0 0.0
    %900 = vmatpush.msra.mxu0 0.0
    %901 = vmatpush.msra.mxu0 0.0
    %902 = vmatpush.msra.mxu0 0.0
    %903 = vmatpush.msra.mxu0 0.0
    %904 = vmatpush.msra.mxu0 0.0
    %905 = vmatpush.msra.mxu0 0.0
    %906 = vmatpush.msra.mxu0 0.0
    %907 = vmatpush.msra.mxu0 %v860
    %908 = vmatpush.msra.mxu0 %v857
    %909 = vmatmul.f32.gmra.mxu0 %v738
    %v910 = vpop.f32.mrf.mxu0
    %v911 = vadd.f32 %v888, %v910
    %912 = vmatmul.f32.gmra.mxu0 %v741
    %v913 = vpop.f32.mrf.mxu0
    %v914 = vadd.f32 %v890, %v913
    %915 = vdwg.mxu0
    %916 = vmatpush.msra.mxu0 0.0
    %917 = vmatpush.msra.mxu0 0.0
    %918 = vmatpush.msra.mxu0 0.0
    %919 = vmatpush.msra.mxu0 0.0
    %920 = vmatpush.msra.mxu0 0.0
    %921 = vmatpush.msra.mxu0 0.0
    %922 = vmatpush.msra.mxu0 0.0
    %923 = vmatpush.msra.mxu0 0.0
    %924 = vmatpush.msra.mxu0 0.0
    %925 = vmatpush.msra.mxu0 0.0
    %926 = vmatpush.msra.mxu0 0.0
    %927 = vmatpush.msra.mxu0 0.0
    %928 = vmatpush.msra.mxu0 0.0
    %929 = vmatpush.msra.mxu0 0.0
    %930 = vmatpush.msra.mxu0 %v883
    %931 = vmatpush.msra.mxu0 %v880
    %932 = vmatmul.f32.gmra.mxu0 %v769
    %v933 = vpop.f32.mrf.mxu0
    %v934 = vadd.f32 0.0, %v933
    %935 = vmatmul.f32.gmra.mxu0 %v772
    %v936 = vpop.f32.mrf.mxu0
    %v937 = vadd.f32 0.0, %v936
    %938 = vdwg.mxu0
    %v939 = vadd.f32 %v911, %v934
    %v940 = vadd.f32 %v914, %v937
    %v941 = vld [vmem:[#allocation11] sm:$0x1]
    %v943 = vperm.slane %v941, 0
    %v945 = vadd.f32 %v939, %v943
    %v946 = vadd.f32 %v940, %v943
    %vm947 = vcmp.gt.f32.partialorder %v945, 0.0
    %vm948 = vcmp.gt.f32.partialorder %v946, 0.0
    %v949 = vmin.f32 %v945, 0.0
    %v950 = vmin.f32 %v946, 0.0
    %v951 = vmul.f32 %v949, 1.442695
    %v952 = vpow.pop %v951
    %v953 = vmul.f32 %v950, 1.442695
    %v954 = vpow.pop %v953
    %v955 = vsub.f32 %v952, 1.0
    %v956 = vsub.f32 %v954, 1.0
    %v957 = vsel %vm947, %v945, %v955
    %v958 = vsel %vm948, %v946, %v956
    %v959 = vld [vmem:[#allocation22] sm:$0xff]
    %v960 = vld [vmem:[#allocation22 + $0x8] sm:$0xff]
    %v961 = vld [vmem:[#allocation22 + $0x10] sm:$0xff]
    %v962 = vld [vmem:[#allocation22 + $0x18] sm:$0xff]
    %v963 = vld [vmem:[#allocation22 + $0x20] sm:$0xff]
    %v964 = vld [vmem:[#allocation22 + $0x28] sm:$0xff]
    %v965 = vld [vmem:[#allocation22 + $0x30] sm:$0xff]
    %v966 = vld [vmem:[#allocation22 + $0x38] sm:$0xff]
    %v968 = vsel %vm673, %v957, 0
    %v971 = vsel %vm673, %v958, 0
    %973 = vmatpush.msra.mxu0 0.0
    %974 = vmatpush.msra.mxu0 0.0
    %975 = vmatpush.msra.mxu0 0.0
    %976 = vmatpush.msra.mxu0 0.0
    %977 = vmatpush.msra.mxu0 0.0
    %978 = vmatpush.msra.mxu0 0.0
    %979 = vmatpush.msra.mxu0 0.0
    %980 = vmatpush.msra.mxu0 0.0
    %981 = vmatpush.msra.mxu0 %v966
    %982 = vmatpush.msra.mxu0 %v965
    %983 = vmatpush.msra.mxu0 %v964
    %984 = vmatpush.msra.mxu0 %v963
    %985 = vmatpush.msra.mxu0 %v962
    %986 = vmatpush.msra.mxu0 %v961
    %987 = vmatpush.msra.mxu0 %v960
    %988 = vmatpush.msra.mxu0 %v959
    %989 = vmatmul.f32.gmra.mxu0 %v968
    %v990 = vpop.f32.mrf.mxu0
    %v991 = vadd.f32 0.0, %v990
    %992 = vmatmul.f32.gmra.mxu0 %v971
    %v993 = vpop.f32.mrf.mxu0
    %v994 = vadd.f32 0.0, %v993
    %995 = vdwg.mxu0
    %v996 = vld [vmem:[%s20] sm:$0xff]
    %v997 = vld [vmem:[%s20 + $0x8] sm:$0xff]
    %v998 = vld [vmem:[%s20 + $0x10] sm:$0xff]
    %v999 = vld [vmem:[%s20 + $0x18] sm:$0xff]
    %v1001 = vsel %vm736, %v996, 0
    %v1004 = vsel %vm736, %v997, 0
    %v1007 = vsel %vm736, %v998, 0
    %v1010 = vsel %vm736, %v999, 0
    %1012 = vmatpush.msra.mxu0 0.0
    %1013 = vmatpush.msra.mxu0 0.0
    %1014 = vmatpush.msra.mxu0 0.0
    %1015 = vmatpush.msra.mxu0 0.0
    %1016 = vmatpush.msra.mxu0 0.0
    %1017 = vmatpush.msra.mxu0 0.0
    %1018 = vmatpush.msra.mxu0 0.0
    %1019 = vmatpush.msra.mxu0 0.0
    %1020 = vmatpush.msra.mxu0 0.0
    %1021 = vmatpush.msra.mxu0 0.0
    %1022 = vmatpush.msra.mxu0 0.0
    %1023 = vmatpush.msra.mxu0 0.0
    %1024 = vmatpush.msra.mxu0 0.0
    %1025 = vmatpush.msra.mxu0 0.0
    %1026 = vmatpush.msra.mxu0 %v994
    %1027 = vmatpush.msra.mxu0 %v991
    %1028 = vmatmul.f32.gmra.mxu0 %v1001
    %v1029 = vpop.f32.mrf.mxu0
    %v1030 = vadd.f32 0.0, %v1029
    %1031 = vmatmul.f32.gmra.mxu0 %v1004
    %v1032 = vpop.f32.mrf.mxu0
    %v1033 = vadd.f32 0.0, %v1032
    %1034 = vmatmul.f32.gmra.mxu0 %v1007
    %v1035 = vpop.f32.mrf.mxu0
    %v1036 = vadd.f32 0.0, %v1035
    %1037 = vmatmul.f32.gmra.mxu0 %v1010
    %v1038 = vpop.f32.mrf.mxu0
    %v1039 = vadd.f32 0.0, %v1038
    %1040 = vdwg.mxu0
    %v1041 = vld [vmem:[%s10] sm:$0xff]
    %v1042 = vld [vmem:[%s10 + $0x8] sm:$0xff]
    %v1043 = vld [vmem:[%s10 + $0x10] sm:$0xff]
    %v1044 = vld [vmem:[%s10 + $0x18] sm:$0xff]
    %v1045 = vld [vmem:[%s10 + $0x20] sm:$0xff]
    %v1046 = vld [vmem:[%s10 + $0x28] sm:$0xff]
    %v1047 = vld [vmem:[%s10 + $0x30] sm:$0xff]
    %v1048 = vld [vmem:[%s10 + $0x38] sm:$0xff]
    %v1049 = vld [vmem:[%s10 + $0x40] sm:$0xff]
    %v1050 = vld [vmem:[%s10 + $0x48] sm:$0xff]
    %v1051 = vld [vmem:[%s10 + $0x50] sm:$0xff]
    %v1052 = vld [vmem:[%s10 + $0x58] sm:$0xff]
    %v1053 = vld [vmem:[%s10 + $0x60] sm:$0xff]
    %v1054 = vld [vmem:[%s10 + $0x68] sm:$0xff]
    %v1055 = vld [vmem:[%s10 + $0x70] sm:$0xff]
    %v1056 = vld [vmem:[%s10 + $0x78] sm:$0xff]
    %v1057 = vld [vmem:[%s10 + $0x80] sm:$0xff]
    %v1058 = vld [vmem:[%s10 + $0x88] sm:$0xff]
    %v1059 = vld [vmem:[%s10 + $0x90] sm:$0xff]
    %v1060 = vld [vmem:[%s10 + $0x98] sm:$0xff]
    %v1061 = vld [vmem:[%s10 + $0xa0] sm:$0xff]
    %v1062 = vld [vmem:[%s10 + $0xa8] sm:$0xff]
    %v1063 = vld [vmem:[%s10 + $0xb0] sm:$0xff]
    %v1064 = vld [vmem:[%s10 + $0xb8] sm:$0xff]
    %v1065 = vld [vmem:[%s10 + $0xc0] sm:$0xff]
    %v1066 = vld [vmem:[%s10 + $0xc8] sm:$0xff]
    %v1067 = vld [vmem:[%s10 + $0xd0] sm:$0xff]
    %v1068 = vld [vmem:[%s10 + $0xd8] sm:$0xff]
    %v1069 = vld [vmem:[%s10 + $0xe0] sm:$0xff]
    %v1070 = vld [vmem:[%s10 + $0xe8] sm:$0xff]
    %v1071 = vld [vmem:[%s10 + $0xf0] sm:$0xff]
    %v1072 = vld [vmem:[%s10 + $0xf8] sm:$0xff]
    %v1073 = vld [vmem:[%s10 + $0x100] sm:$0xff]
    %v1074 = vld [vmem:[%s10 + $0x108] sm:$0xff]
    %v1075 = vld [vmem:[%s10 + $0x110] sm:$0xff]
    %v1076 = vld [vmem:[%s10 + $0x118] sm:$0xff]
    %v1077 = vld [vmem:[%s10 + $0x120] sm:$0xff]
    %v1078 = vld [vmem:[%s10 + $0x128] sm:$0xff]
    %v1079 = vld [vmem:[%s10 + $0x130] sm:$0xff]
    %v1080 = vld [vmem:[%s10 + $0x138] sm:$0xff]
    %v1081 = vld [vmem:[%s10 + $0x140] sm:$0xff]
    %v1082 = vld [vmem:[%s10 + $0x148] sm:$0xff]
    %v1083 = vld [vmem:[%s10 + $0x150] sm:$0xff]
    %v1084 = vld [vmem:[%s10 + $0x158] sm:$0xff]
    %v1085 = vld [vmem:[%s10 + $0x160] sm:$0xff]
    %v1086 = vld [vmem:[%s10 + $0x168] sm:$0xff]
    %v1087 = vld [vmem:[%s10 + $0x170] sm:$0xff]
    %v1088 = vld [vmem:[%s10 + $0x178] sm:$0xff]
    %1089 = vmatpush.msra.mxu0 %v1086
    %1090 = vmatpush.msra.mxu0 %v1083
    %1091 = vmatpush.msra.mxu0 %v1080
    %1092 = vmatpush.msra.mxu0 %v1077
    %1093 = vmatpush.msra.mxu0 %v1074
    %1094 = vmatpush.msra.mxu0 %v1071
    %1095 = vmatpush.msra.mxu0 %v1068
    %1096 = vmatpush.msra.mxu0 %v1065
    %1097 = vmatpush.msra.mxu0 %v1062
    %1098 = vmatpush.msra.mxu0 %v1059
    %1099 = vmatpush.msra.mxu0 %v1056
    %1100 = vmatpush.msra.mxu0 %v1053
    %1101 = vmatpush.msra.mxu0 %v1050
    %1102 = vmatpush.msra.mxu0 %v1047
    %1103 = vmatpush.msra.mxu0 %v1044
    %1104 = vmatpush.msra.mxu0 %v1041
    %1105 = vmatmul.f32.gmra.mxu0 %v1030
    %v1106 = vpop.f32.mrf.mxu0
    %v1107 = vadd.f32 0.0, %v1106
    %1108 = vmatmul.f32.gmra.mxu0 %v1033
    %v1109 = vpop.f32.mrf.mxu0
    %v1110 = vadd.f32 0.0, %v1109
    %1111 = vmatmul.f32.gmra.mxu0 %v1036
    %v1112 = vpop.f32.mrf.mxu0
    %v1113 = vadd.f32 0.0, %v1112
    %1114 = vmatmul.f32.gmra.mxu0 %v1039
    %v1115 = vpop.f32.mrf.mxu0
    %v1116 = vadd.f32 0.0, %v1115
    %1117 = vdwg.mxu0
    %1118 = vmatpush.msra.mxu0 %v1087
    %1119 = vmatpush.msra.mxu0 %v1084
    %1120 = vmatpush.msra.mxu0 %v1081
    %1121 = vmatpush.msra.mxu0 %v1078
    %1122 = vmatpush.msra.mxu0 %v1075
    %1123 = vmatpush.msra.mxu0 %v1072
    %1124 = vmatpush.msra.mxu0 %v1069
    %1125 = vmatpush.msra.mxu0 %v1066
    %1126 = vmatpush.msra.mxu0 %v1063
    %1127 = vmatpush.msra.mxu0 %v1060
    %1128 = vmatpush.msra.mxu0 %v1057
    %1129 = vmatpush.msra.mxu0 %v1054
    %1130 = vmatpush.msra.mxu0 %v1051
    %1131 = vmatpush.msra.mxu0 %v1048
    %1132 = vmatpush.msra.mxu0 %v1045
    %1133 = vmatpush.msra.mxu0 %v1042
    %1134 = vmatmul.f32.gmra.mxu0 %v1030
    %v1135 = vpop.f32.mrf.mxu0
    %v1136 = vadd.f32 0.0, %v1135
    %1137 = vmatmul.f32.gmra.mxu0 %v1033
    %v1138 = vpop.f32.mrf.mxu0
    %v1139 = vadd.f32 0.0, %v1138
    %1140 = vmatmul.f32.gmra.mxu0 %v1036
    %v1141 = vpop.f32.mrf.mxu0
    %v1142 = vadd.f32 0.0, %v1141
    %1143 = vmatmul.f32.gmra.mxu0 %v1039
    %v1144 = vpop.f32.mrf.mxu0
    %v1145 = vadd.f32 0.0, %v1144
    %1146 = vdwg.mxu0
    %1147 = vmatpush.msra.mxu0 %v1088
    %1148 = vmatpush.msra.mxu0 %v1085
    %1149 = vmatpush.msra.mxu0 %v1082
    %1150 = vmatpush.msra.mxu0 %v1079
    %1151 = vmatpush.msra.mxu0 %v1076
    %1152 = vmatpush.msra.mxu0 %v1073
    %1153 = vmatpush.msra.mxu0 %v1070
    %1154 = vmatpush.msra.mxu0 %v1067
    %1155 = vmatpush.msra.mxu0 %v1064
    %1156 = vmatpush.msra.mxu0 %v1061
    %1157 = vmatpush.msra.mxu0 %v1058
    %1158 = vmatpush.msra.mxu0 %v1055
    %1159 = vmatpush.msra.mxu0 %v1052
    %1160 = vmatpush.msra.mxu0 %v1049
    %1161 = vmatpush.msra.mxu0 %v1046
    %1162 = vmatpush.msra.mxu0 %v1043
    %1163 = vmatmul.f32.gmra.mxu0 %v1030
    %v1164 = vpop.f32.mrf.mxu0
    %v1165 = vadd.f32 0.0, %v1164
    %1166 = vmatmul.f32.gmra.mxu0 %v1033
    %v1167 = vpop.f32.mrf.mxu0
    %v1168 = vadd.f32 0.0, %v1167
    %1169 = vmatmul.f32.gmra.mxu0 %v1036
    %v1170 = vpop.f32.mrf.mxu0
    %v1171 = vadd.f32 0.0, %v1170
    %1172 = vmatmul.f32.gmra.mxu0 %v1039
    %v1173 = vpop.f32.mrf.mxu0
    %v1174 = vadd.f32 0.0, %v1173
    %1175 = vdwg.mxu0
    %v1176 = vld [vmem:[#allocation20] sm:$0xff]
    %v1177 = vld [vmem:[#allocation20 + $0x8] sm:$0xff]
    %v1178 = vld [vmem:[#allocation20 + $0x10] sm:$0xff]
    %v1179 = vld [vmem:[#allocation20 + $0x18] sm:$0xff]
    %v1181 = vsel %vm287, %v1176, 0
    %v1184 = vsel %vm287, %v1177, 0
    %v1187 = vsel %vm287, %v1178, 0
    %v1190 = vsel %vm287, %v1179, 0
    %1192 = vmatpush.msra.mxu0 0.0
    %1193 = vmatpush.msra.mxu0 0.0
    %1194 = vmatpush.msra.mxu0 0.0
    %1195 = vmatpush.msra.mxu0 0.0
    %1196 = vmatpush.msra.mxu0 0.0
    %1197 = vmatpush.msra.mxu0 0.0
    %1198 = vmatpush.msra.mxu0 0.0
    %1199 = vmatpush.msra.mxu0 0.0
    %1200 = vmatpush.msra.mxu0 0.0
    %1201 = vmatpush.msra.mxu0 0.0
    %1202 = vmatpush.msra.mxu0 0.0
    %1203 = vmatpush.msra.mxu0 0.0
    %1204 = vmatpush.msra.mxu0 %v1116
    %1205 = vmatpush.msra.mxu0 %v1113
    %1206 = vmatpush.msra.mxu0 %v1110
    %1207 = vmatpush.msra.mxu0 %v1107
    %1208 = vmatmul.f32.gmra.mxu0 %v1181
    %v1209 = vpop.f32.mrf.mxu0
    %v1210 = vadd.f32 %v1136, %v1209
    %1211 = vmatmul.f32.gmra.mxu0 %v1184
    %v1212 = vpop.f32.mrf.mxu0
    %v1213 = vadd.f32 %v1139, %v1212
    %1214 = vmatmul.f32.gmra.mxu0 %v1187
    %v1215 = vpop.f32.mrf.mxu0
    %v1216 = vadd.f32 %v1142, %v1215
    %1217 = vmatmul.f32.gmra.mxu0 %v1190
    %v1218 = vpop.f32.mrf.mxu0
    %v1219 = vadd.f32 %v1145, %v1218
    %1220 = vdwg.mxu0
    %v1221 = vld [vmem:[#allocation19] sm:$0xff]
    %v1222 = vld [vmem:[#allocation19 + $0x8] sm:$0xff]
    %v1223 = vld [vmem:[#allocation19 + $0x10] sm:$0xff]
    %v1224 = vld [vmem:[#allocation19 + $0x18] sm:$0xff]
    %v1226 = vsel %vm287, %v1221, 0
    %v1229 = vsel %vm287, %v1222, 0
    %v1232 = vsel %vm287, %v1223, 0
    %v1235 = vsel %vm287, %v1224, 0
    %1237 = vmatpush.msra.mxu0 0.0
    %1238 = vmatpush.msra.mxu0 0.0
    %1239 = vmatpush.msra.mxu0 0.0
    %1240 = vmatpush.msra.mxu0 0.0
    %1241 = vmatpush.msra.mxu0 0.0
    %1242 = vmatpush.msra.mxu0 0.0
    %1243 = vmatpush.msra.mxu0 0.0
    %1244 = vmatpush.msra.mxu0 0.0
    %1245 = vmatpush.msra.mxu0 0.0
    %1246 = vmatpush.msra.mxu0 0.0
    %1247 = vmatpush.msra.mxu0 0.0
    %1248 = vmatpush.msra.mxu0 0.0
    %1249 = vmatpush.msra.mxu0 %v1174
    %1250 = vmatpush.msra.mxu0 %v1171
    %1251 = vmatpush.msra.mxu0 %v1168
    %1252 = vmatpush.msra.mxu0 %v1165
    %1253 = vmatmul.f32.gmra.mxu0 %v1226
    %v1254 = vpop.f32.mrf.mxu0
    %v1255 = vadd.f32 0.0, %v1254
    %1256 = vmatmul.f32.gmra.mxu0 %v1229
    %v1257 = vpop.f32.mrf.mxu0
    %v1258 = vadd.f32 0.0, %v1257
    %1259 = vmatmul.f32.gmra.mxu0 %v1232
    %v1260 = vpop.f32.mrf.mxu0
    %v1261 = vadd.f32 0.0, %v1260
    %1262 = vmatmul.f32.gmra.mxu0 %v1235
    %v1263 = vpop.f32.mrf.mxu0
    %v1264 = vadd.f32 0.0, %v1263
    %1265 = vdwg.mxu0
    %v1266 = vadd.f32 %v1210, %v1255
    %v1267 = vadd.f32 %v1213, %v1258
    %v1268 = vadd.f32 %v1216, %v1261
    %v1269 = vadd.f32 %v1219, %v1264
    %v1270 = vld [vmem:[#allocation13] sm:$0x1]
    %v1272 = vperm.slane %v1270, 0
    %v1274 = vadd.f32 %v1266, %v1272
    %v1275 = vadd.f32 %v1267, %v1272
    %v1276 = vadd.f32 %v1268, %v1272
    %v1277 = vadd.f32 %v1269, %v1272
    %vm1278 = vcmp.gt.f32.partialorder %v1274, 0.0
    %vm1279 = vcmp.gt.f32.partialorder %v1275, 0.0
    %vm1280 = vcmp.gt.f32.partialorder %v1276, 0.0
    %vm1281 = vcmp.gt.f32.partialorder %v1277, 0.0
    %v1282 = vmin.f32 %v1274, 0.0
    %v1283 = vmin.f32 %v1275, 0.0
    %v1284 = vmin.f32 %v1276, 0.0
    %v1285 = vmin.f32 %v1277, 0.0
    %v1286 = vmul.f32 %v1282, 1.442695
    %v1287 = vpow.pop %v1286
    %v1288 = vmul.f32 %v1283, 1.442695
    %v1289 = vpow.pop %v1288
    %v1290 = vmul.f32 %v1284, 1.442695
    %v1291 = vpow.pop %v1290
    %v1292 = vmul.f32 %v1285, 1.442695
    %v1293 = vpow.pop %v1292
    %v1294 = vsub.f32 %v1287, 1.0
    %v1295 = vsub.f32 %v1289, 1.0
    %v1296 = vsub.f32 %v1291, 1.0
    %v1297 = vsub.f32 %v1293, 1.0
    %v1298 = vsel %vm1278, %v1274, %v1294
    %v1299 = vsel %vm1279, %v1275, %v1295
    %v1300 = vsel %vm1280, %v1276, %v1296
    %v1301 = vsel %vm1281, %v1277, %v1297
    %v1302 = vld [vmem:[%s12] sm:$0xff]
    %v1303 = vld [vmem:[%s12 + $0x8] sm:$0xff]
    %v1304 = vld [vmem:[%s12 + $0x10] sm:$0xff]
    %v1305 = vld [vmem:[%s12 + $0x18] sm:$0xff]
    %v1306 = vld [vmem:[%s12 + $0x20] sm:$0xff]
    %v1307 = vld [vmem:[%s12 + $0x28] sm:$0xff]
    %v1308 = vld [vmem:[%s12 + $0x30] sm:$0xff]
    %v1309 = vld [vmem:[%s12 + $0x38] sm:$0xff]
    %v1310 = vld [vmem:[%s12 + $0x40] sm:$0xff]
    %v1311 = vld [vmem:[%s12 + $0x48] sm:$0xff]
    %v1312 = vld [vmem:[%s12 + $0x50] sm:$0xff]
    %v1313 = vld [vmem:[%s12 + $0x58] sm:$0xff]
    %v1314 = vld [vmem:[%s12 + $0x60] sm:$0xff]
    %v1315 = vld [vmem:[%s12 + $0x68] sm:$0xff]
    %v1316 = vld [vmem:[%s12 + $0x70] sm:$0xff]
    %v1317 = vld [vmem:[%s12 + $0x78] sm:$0xff]
    %v1318 = vld [vmem:[%s12 + $0x80] sm:$0xff]
    %v1319 = vld [vmem:[%s12 + $0x88] sm:$0xff]
    %v1320 = vld [vmem:[%s12 + $0x90] sm:$0xff]
    %v1321 = vld [vmem:[%s12 + $0x98] sm:$0xff]
    %v1322 = vld [vmem:[%s12 + $0xa0] sm:$0xff]
    %v1323 = vld [vmem:[%s12 + $0xa8] sm:$0xff]
    %v1324 = vld [vmem:[%s12 + $0xb0] sm:$0xff]
    %v1325 = vld [vmem:[%s12 + $0xb8] sm:$0xff]
    %v1326 = vld [vmem:[%s12 + $0xc0] sm:$0xff]
    %v1327 = vld [vmem:[%s12 + $0xc8] sm:$0xff]
    %v1328 = vld [vmem:[%s12 + $0xd0] sm:$0xff]
    %v1329 = vld [vmem:[%s12 + $0xd8] sm:$0xff]
    %v1330 = vld [vmem:[%s12 + $0xe0] sm:$0xff]
    %v1331 = vld [vmem:[%s12 + $0xe8] sm:$0xff]
    %v1332 = vld [vmem:[%s12 + $0xf0] sm:$0xff]
    %v1333 = vld [vmem:[%s12 + $0xf8] sm:$0xff]
    %v1334 = vld [vmem:[%s12 + $0x100] sm:$0xff]
    %v1335 = vld [vmem:[%s12 + $0x108] sm:$0xff]
    %v1336 = vld [vmem:[%s12 + $0x110] sm:$0xff]
    %v1337 = vld [vmem:[%s12 + $0x118] sm:$0xff]
    %v1338 = vld [vmem:[%s12 + $0x120] sm:$0xff]
    %v1339 = vld [vmem:[%s12 + $0x128] sm:$0xff]
    %v1340 = vld [vmem:[%s12 + $0x130] sm:$0xff]
    %v1341 = vld [vmem:[%s12 + $0x138] sm:$0xff]
    %v1342 = vld [vmem:[%s12 + $0x140] sm:$0xff]
    %v1343 = vld [vmem:[%s12 + $0x148] sm:$0xff]
    %v1344 = vld [vmem:[%s12 + $0x150] sm:$0xff]
    %v1345 = vld [vmem:[%s12 + $0x158] sm:$0xff]
    %v1346 = vld [vmem:[%s12 + $0x160] sm:$0xff]
    %v1347 = vld [vmem:[%s12 + $0x168] sm:$0xff]
    %v1348 = vld [vmem:[%s12 + $0x170] sm:$0xff]
    %v1349 = vld [vmem:[%s12 + $0x178] sm:$0xff]
    %1350 = vmatpush.msra.mxu0 %v1347
    %1351 = vmatpush.msra.mxu0 %v1344
    %1352 = vmatpush.msra.mxu0 %v1341
    %1353 = vmatpush.msra.mxu0 %v1338
    %1354 = vmatpush.msra.mxu0 %v1335
    %1355 = vmatpush.msra.mxu0 %v1332
    %1356 = vmatpush.msra.mxu0 %v1329
    %1357 = vmatpush.msra.mxu0 %v1326
    %1358 = vmatpush.msra.mxu0 %v1323
    %1359 = vmatpush.msra.mxu0 %v1320
    %1360 = vmatpush.msra.mxu0 %v1317
    %1361 = vmatpush.msra.mxu0 %v1314
    %1362 = vmatpush.msra.mxu0 %v1311
    %1363 = vmatpush.msra.mxu0 %v1308
    %1364 = vmatpush.msra.mxu0 %v1305
    %1365 = vmatpush.msra.mxu0 %v1302
    %1366 = vmatmul.f32.gmra.mxu0 %v1298
    %v1367 = vpop.f32.mrf.mxu0
    %v1368 = vadd.f32 0.0, %v1367
    %1369 = vmatmul.f32.gmra.mxu0 %v1299
    %v1370 = vpop.f32.mrf.mxu0
    %v1371 = vadd.f32 0.0, %v1370
    %1372 = vmatmul.f32.gmra.mxu0 %v1300
    %v1373 = vpop.f32.mrf.mxu0
    %v1374 = vadd.f32 0.0, %v1373
    %1375 = vmatmul.f32.gmra.mxu0 %v1301
    %v1376 = vpop.f32.mrf.mxu0
    %v1377 = vadd.f32 0.0, %v1376
    %1378 = vdwg.mxu0
    %1379 = vmatpush.msra.mxu0 %v1348
    %1380 = vmatpush.msra.mxu0 %v1345
    %1381 = vmatpush.msra.mxu0 %v1342
    %1382 = vmatpush.msra.mxu0 %v1339
    %1383 = vmatpush.msra.mxu0 %v1336
    %1384 = vmatpush.msra.mxu0 %v1333
    %1385 = vmatpush.msra.mxu0 %v1330
    %1386 = vmatpush.msra.mxu0 %v1327
    %1387 = vmatpush.msra.mxu0 %v1324
    %1388 = vmatpush.msra.mxu0 %v1321
    %1389 = vmatpush.msra.mxu0 %v1318
    %1390 = vmatpush.msra.mxu0 %v1315
    %1391 = vmatpush.msra.mxu0 %v1312
    %1392 = vmatpush.msra.mxu0 %v1309
    %1393 = vmatpush.msra.mxu0 %v1306
    %1394 = vmatpush.msra.mxu0 %v1303
    %1395 = vmatmul.f32.gmra.mxu0 %v1298
    %v1396 = vpop.f32.mrf.mxu0
    %v1397 = vadd.f32 0.0, %v1396
    %1398 = vmatmul.f32.gmra.mxu0 %v1299
    %v1399 = vpop.f32.mrf.mxu0
    %v1400 = vadd.f32 0.0, %v1399
    %1401 = vmatmul.f32.gmra.mxu0 %v1300
    %v1402 = vpop.f32.mrf.mxu0
    %v1403 = vadd.f32 0.0, %v1402
    %1404 = vmatmul.f32.gmra.mxu0 %v1301
    %v1405 = vpop.f32.mrf.mxu0
    %v1406 = vadd.f32 0.0, %v1405
    %1407 = vdwg.mxu0
    %1408 = vmatpush.msra.mxu0 %v1349
    %1409 = vmatpush.msra.mxu0 %v1346
    %1410 = vmatpush.msra.mxu0 %v1343
    %1411 = vmatpush.msra.mxu0 %v1340
    %1412 = vmatpush.msra.mxu0 %v1337
    %1413 = vmatpush.msra.mxu0 %v1334
    %1414 = vmatpush.msra.mxu0 %v1331
    %1415 = vmatpush.msra.mxu0 %v1328
    %1416 = vmatpush.msra.mxu0 %v1325
    %1417 = vmatpush.msra.mxu0 %v1322
    %1418 = vmatpush.msra.mxu0 %v1319
    %1419 = vmatpush.msra.mxu0 %v1316
    %1420 = vmatpush.msra.mxu0 %v1313
    %1421 = vmatpush.msra.mxu0 %v1310
    %1422 = vmatpush.msra.mxu0 %v1307
    %1423 = vmatpush.msra.mxu0 %v1304
    %1424 = vmatmul.f32.gmra.mxu0 %v1298
    %v1425 = vpop.f32.mrf.mxu0
    %v1426 = vadd.f32 0.0, %v1425
    %1427 = vmatmul.f32.gmra.mxu0 %v1299
    %v1428 = vpop.f32.mrf.mxu0
    %v1429 = vadd.f32 0.0, %v1428
    %1430 = vmatmul.f32.gmra.mxu0 %v1300
    %v1431 = vpop.f32.mrf.mxu0
    %v1432 = vadd.f32 0.0, %v1431
    %1433 = vmatmul.f32.gmra.mxu0 %v1301
    %v1434 = vpop.f32.mrf.mxu0
    %v1435 = vadd.f32 0.0, %v1434
    %1436 = vdwg.mxu0
    %1437 = vmatpush.msra.mxu0 0.0
    %1438 = vmatpush.msra.mxu0 0.0
    %1439 = vmatpush.msra.mxu0 0.0
    %1440 = vmatpush.msra.mxu0 0.0
    %1441 = vmatpush.msra.mxu0 0.0
    %1442 = vmatpush.msra.mxu0 0.0
    %1443 = vmatpush.msra.mxu0 0.0
    %1444 = vmatpush.msra.mxu0 0.0
    %1445 = vmatpush.msra.mxu0 0.0
    %1446 = vmatpush.msra.mxu0 0.0
    %1447 = vmatpush.msra.mxu0 0.0
    %1448 = vmatpush.msra.mxu0 0.0
    %1449 = vmatpush.msra.mxu0 %v1377
    %1450 = vmatpush.msra.mxu0 %v1374
    %1451 = vmatpush.msra.mxu0 %v1371
    %1452 = vmatpush.msra.mxu0 %v1368
    %1453 = vmatmul.f32.gmra.mxu0 %v1181
    %v1454 = vpop.f32.mrf.mxu0
    %v1455 = vadd.f32 %v1397, %v1454
    %1456 = vmatmul.f32.gmra.mxu0 %v1184
    %v1457 = vpop.f32.mrf.mxu0
    %v1458 = vadd.f32 %v1400, %v1457
    %1459 = vmatmul.f32.gmra.mxu0 %v1187
    %v1460 = vpop.f32.mrf.mxu0
    %v1461 = vadd.f32 %v1403, %v1460
    %1462 = vmatmul.f32.gmra.mxu0 %v1190
    %v1463 = vpop.f32.mrf.mxu0
    %v1464 = vadd.f32 %v1406, %v1463
    %1465 = vdwg.mxu0
    %1466 = vmatpush.msra.mxu0 0.0
    %1467 = vmatpush.msra.mxu0 0.0
    %1468 = vmatpush.msra.mxu0 0.0
    %1469 = vmatpush.msra.mxu0 0.0
    %1470 = vmatpush.msra.mxu0 0.0
    %1471 = vmatpush.msra.mxu0 0.0
    %1472 = vmatpush.msra.mxu0 0.0
    %1473 = vmatpush.msra.mxu0 0.0
    %1474 = vmatpush.msra.mxu0 0.0
    %1475 = vmatpush.msra.mxu0 0.0
    %1476 = vmatpush.msra.mxu0 0.0
    %1477 = vmatpush.msra.mxu0 0.0
    %1478 = vmatpush.msra.mxu0 %v1435
    %1479 = vmatpush.msra.mxu0 %v1432
    %1480 = vmatpush.msra.mxu0 %v1429
    %1481 = vmatpush.msra.mxu0 %v1426
    %1482 = vmatmul.f32.gmra.mxu0 %v1226
    %v1483 = vpop.f32.mrf.mxu0
    %v1484 = vadd.f32 0.0, %v1483
    %1485 = vmatmul.f32.gmra.mxu0 %v1229
    %v1486 = vpop.f32.mrf.mxu0
    %v1487 = vadd.f32 0.0, %v1486
    %1488 = vmatmul.f32.gmra.mxu0 %v1232
    %v1489 = vpop.f32.mrf.mxu0
    %v1490 = vadd.f32 0.0, %v1489
    %1491 = vmatmul.f32.gmra.mxu0 %v1235
    %v1492 = vpop.f32.mrf.mxu0
    %v1493 = vadd.f32 0.0, %v1492
    %1494 = vdwg.mxu0
    %v1495 = vadd.f32 %v1455, %v1484
    %v1496 = vadd.f32 %v1458, %v1487
    %v1497 = vadd.f32 %v1461, %v1490
    %v1498 = vadd.f32 %v1464, %v1493
    %v1499 = vld [vmem:[#allocation14] sm:$0x1]
    %v1501 = vperm.slane %v1499, 0
    %v1503 = vadd.f32 %v1495, %v1501
    %v1504 = vadd.f32 %v1496, %v1501
    %v1505 = vadd.f32 %v1497, %v1501
    %v1506 = vadd.f32 %v1498, %v1501
    %vm1507 = vcmp.gt.f32.partialorder %v1503, 0.0
    %vm1508 = vcmp.gt.f32.partialorder %v1504, 0.0
    %vm1509 = vcmp.gt.f32.partialorder %v1505, 0.0
    %vm1510 = vcmp.gt.f32.partialorder %v1506, 0.0
    %v1511 = vmin.f32 %v1503, 0.0
    %v1512 = vmin.f32 %v1504, 0.0
    %v1513 = vmin.f32 %v1505, 0.0
    %v1514 = vmin.f32 %v1506, 0.0
    %v1515 = vmul.f32 %v1511, 1.442695
    %v1516 = vpow.pop %v1515
    %v1517 = vmul.f32 %v1512, 1.442695
    %v1518 = vpow.pop %v1517
    %v1519 = vmul.f32 %v1513, 1.442695
    %v1520 = vpow.pop %v1519
    %v1521 = vmul.f32 %v1514, 1.442695
    %v1522 = vpow.pop %v1521
    %v1523 = vsub.f32 %v1516, 1.0
    %v1524 = vsub.f32 %v1518, 1.0
    %v1525 = vsub.f32 %v1520, 1.0
    %v1526 = vsub.f32 %v1522, 1.0
    %v1527 = vsel %vm1507, %v1503, %v1523
    %v1528 = vsel %vm1508, %v1504, %v1524
    %v1529 = vsel %vm1509, %v1505, %v1525
    %v1530 = vsel %vm1510, %v1506, %v1526
    %v1531 = vld [vmem:[%s14] sm:$0xff]
    %v1532 = vld [vmem:[%s14 + $0x8] sm:$0xff]
    %v1533 = vld [vmem:[%s14 + $0x10] sm:$0xff]
    %v1534 = vld [vmem:[%s14 + $0x18] sm:$0xff]
    %v1535 = vld [vmem:[%s14 + $0x20] sm:$0xff]
    %v1536 = vld [vmem:[%s14 + $0x28] sm:$0xff]
    %v1537 = vld [vmem:[%s14 + $0x30] sm:$0xff]
    %v1538 = vld [vmem:[%s14 + $0x38] sm:$0xff]
    %v1539 = vld [vmem:[%s14 + $0x40] sm:$0xff]
    %v1540 = vld [vmem:[%s14 + $0x48] sm:$0xff]
    %v1541 = vld [vmem:[%s14 + $0x50] sm:$0xff]
    %v1542 = vld [vmem:[%s14 + $0x58] sm:$0xff]
    %v1543 = vld [vmem:[%s14 + $0x60] sm:$0xff]
    %v1544 = vld [vmem:[%s14 + $0x68] sm:$0xff]
    %v1545 = vld [vmem:[%s14 + $0x70] sm:$0xff]
    %v1546 = vld [vmem:[%s14 + $0x78] sm:$0xff]
    %v1547 = vld [vmem:[%s14 + $0x80] sm:$0xff]
    %v1548 = vld [vmem:[%s14 + $0x88] sm:$0xff]
    %v1549 = vld [vmem:[%s14 + $0x90] sm:$0xff]
    %v1550 = vld [vmem:[%s14 + $0x98] sm:$0xff]
    %v1551 = vld [vmem:[%s14 + $0xa0] sm:$0xff]
    %v1552 = vld [vmem:[%s14 + $0xa8] sm:$0xff]
    %v1553 = vld [vmem:[%s14 + $0xb0] sm:$0xff]
    %v1554 = vld [vmem:[%s14 + $0xb8] sm:$0xff]
    %v1555 = vld [vmem:[%s14 + $0xc0] sm:$0xff]
    %v1556 = vld [vmem:[%s14 + $0xc8] sm:$0xff]
    %v1557 = vld [vmem:[%s14 + $0xd0] sm:$0xff]
    %v1558 = vld [vmem:[%s14 + $0xd8] sm:$0xff]
    %v1559 = vld [vmem:[%s14 + $0xe0] sm:$0xff]
    %v1560 = vld [vmem:[%s14 + $0xe8] sm:$0xff]
    %v1561 = vld [vmem:[%s14 + $0xf0] sm:$0xff]
    %v1562 = vld [vmem:[%s14 + $0xf8] sm:$0xff]
    %1563 = vmatpush.msra.mxu0 %v1561
    %1564 = vmatpush.msra.mxu0 %v1559
    %1565 = vmatpush.msra.mxu0 %v1557
    %1566 = vmatpush.msra.mxu0 %v1555
    %1567 = vmatpush.msra.mxu0 %v1553
    %1568 = vmatpush.msra.mxu0 %v1551
    %1569 = vmatpush.msra.mxu0 %v1549
    %1570 = vmatpush.msra.mxu0 %v1547
    %1571 = vmatpush.msra.mxu0 %v1545
    %1572 = vmatpush.msra.mxu0 %v1543
    %1573 = vmatpush.msra.mxu0 %v1541
    %1574 = vmatpush.msra.mxu0 %v1539
    %1575 = vmatpush.msra.mxu0 %v1537
    %1576 = vmatpush.msra.mxu0 %v1535
    %1577 = vmatpush.msra.mxu0 %v1533
    %1578 = vmatpush.msra.mxu0 %v1531
    %1579 = vmatmul.f32.gmra.mxu0 %v1527
    %v1580 = vpop.f32.mrf.mxu0
    %v1581 = vadd.f32 0.0, %v1580
    %1582 = vmatmul.f32.gmra.mxu0 %v1528
    %v1583 = vpop.f32.mrf.mxu0
    %v1584 = vadd.f32 0.0, %v1583
    %1585 = vmatmul.f32.gmra.mxu0 %v1529
    %v1586 = vpop.f32.mrf.mxu0
    %v1587 = vadd.f32 0.0, %v1586
    %1588 = vmatmul.f32.gmra.mxu0 %v1530
    %v1589 = vpop.f32.mrf.mxu0
    %v1590 = vadd.f32 0.0, %v1589
    %1591 = vdwg.mxu0
    %1592 = vmatpush.msra.mxu0 %v1562
    %1593 = vmatpush.msra.mxu0 %v1560
    %1594 = vmatpush.msra.mxu0 %v1558
    %1595 = vmatpush.msra.mxu0 %v1556
    %1596 = vmatpush.msra.mxu0 %v1554
    %1597 = vmatpush.msra.mxu0 %v1552
    %1598 = vmatpush.msra.mxu0 %v1550
    %1599 = vmatpush.msra.mxu0 %v1548
    %1600 = vmatpush.msra.mxu0 %v1546
    %1601 = vmatpush.msra.mxu0 %v1544
    %1602 = vmatpush.msra.mxu0 %v1542
    %1603 = vmatpush.msra.mxu0 %v1540
    %1604 = vmatpush.msra.mxu0 %v1538
    %1605 = vmatpush.msra.mxu0 %v1536
    %1606 = vmatpush.msra.mxu0 %v1534
    %1607 = vmatpush.msra.mxu0 %v1532
    %1608 = vmatmul.f32.gmra.mxu0 %v1527
    %v1609 = vpop.f32.mrf.mxu0
    %v1610 = vadd.f32 0.0, %v1609
    %1611 = vmatmul.f32.gmra.mxu0 %v1528
    %v1612 = vpop.f32.mrf.mxu0
    %v1613 = vadd.f32 0.0, %v1612
    %1614 = vmatmul.f32.gmra.mxu0 %v1529
    %v1615 = vpop.f32.mrf.mxu0
    %v1616 = vadd.f32 0.0, %v1615
    %1617 = vmatmul.f32.gmra.mxu0 %v1530
    %v1618 = vpop.f32.mrf.mxu0
    %v1619 = vadd.f32 0.0, %v1618
    %1620 = vdwg.mxu0
    %1625 = vrot.lane.b32.xlu0 %v1581, 80
    %v1626 = vpop.permute.xlu0 %1625
    %1627 = vrot.lane.b32.xlu0 %v1584, 80
    %v1628 = vpop.permute.xlu0 %1627
    %1629 = vrot.lane.b32.xlu0 %v1587, 80
    %v1630 = vpop.permute.xlu0 %1629
    %1631 = vrot.lane.b32.xlu0 %v1590, 80
    %v1632 = vpop.permute.xlu0 %1631
    %1637 = vmatpush.msra.mxu0 0.0
    %1638 = vmatpush.msra.mxu0 0.0
    %1639 = vmatpush.msra.mxu0 0.0
    %1640 = vmatpush.msra.mxu0 0.0
    %1641 = vmatpush.msra.mxu0 0.0
    %1642 = vmatpush.msra.mxu0 0.0
    %1643 = vmatpush.msra.mxu0 0.0
    %1644 = vmatpush.msra.mxu0 0.0
    %1645 = vmatpush.msra.mxu0 0.0
    %1646 = vmatpush.msra.mxu0 0.0
    %1647 = vmatpush.msra.mxu0 0.0
    %1648 = vmatpush.msra.mxu0 0.0
    %1649 = vmatpush.msra.mxu0 %v1590
    %1650 = vmatpush.msra.mxu0 %v1587
    %1651 = vmatpush.msra.mxu0 %v1584
    %1652 = vmatpush.msra.mxu0 %v1581
    %1653 = vmatmul.f32.gmra.mxu0 %v1181
    %v1654 = vpop.f32.mrf.mxu0
    %v1655 = vadd.f32 %v1626, %v1654
    %1656 = vmatmul.f32.gmra.mxu0 %v1184
    %v1657 = vpop.f32.mrf.mxu0
    %v1658 = vadd.f32 %v1628, %v1657
    %1659 = vmatmul.f32.gmra.mxu0 %v1187
    %v1660 = vpop.f32.mrf.mxu0
    %v1661 = vadd.f32 %v1630, %v1660
    %1662 = vmatmul.f32.gmra.mxu0 %v1190
    %v1663 = vpop.f32.mrf.mxu0
    %v1664 = vadd.f32 %v1632, %v1663
    %1665 = vdwg.mxu0
    %1670 = vrot.lane.b32.xlu0 %v1581, 32
    %v1671 = vpop.permute.xlu0 %1670
    %1672 = vrot.lane.b32.xlu0 %v1610, 32
    %v1673 = vpop.permute.xlu0 %1672
    %1674 = vrot.lane.b32.xlu0 %v1584, 32
    %v1675 = vpop.permute.xlu0 %1674
    %1676 = vrot.lane.b32.xlu0 %v1613, 32
    %v1677 = vpop.permute.xlu0 %1676
    %1678 = vrot.lane.b32.xlu0 %v1587, 32
    %v1679 = vpop.permute.xlu0 %1678
    %1680 = vrot.lane.b32.xlu0 %v1616, 32
    %v1681 = vpop.permute.xlu0 %1680
    %1682 = vrot.lane.b32.xlu0 %v1590, 32
    %v1683 = vpop.permute.xlu0 %1682
    %1684 = vrot.lane.b32.xlu0 %v1619, 32
    %v1685 = vpop.permute.xlu0 %1684
    %v1686 = vsel %vm287, %v1671, %v1673
    %v1687 = vsel %vm287, %v1675, %v1677
    %v1688 = vsel %vm287, %v1679, %v1681
    %v1689 = vsel %vm287, %v1683, %v1685
    %1694 = vmatpush.msra.mxu0 0.0
    %1695 = vmatpush.msra.mxu0 0.0
    %1696 = vmatpush.msra.mxu0 0.0
    %1697 = vmatpush.msra.mxu0 0.0
    %1698 = vmatpush.msra.mxu0 0.0
    %1699 = vmatpush.msra.mxu0 0.0
    %1700 = vmatpush.msra.mxu0 0.0
    %1701 = vmatpush.msra.mxu0 0.0
    %1702 = vmatpush.msra.mxu0 0.0
    %1703 = vmatpush.msra.mxu0 0.0
    %1704 = vmatpush.msra.mxu0 0.0
    %1705 = vmatpush.msra.mxu0 0.0
    %1706 = vmatpush.msra.mxu0 %v1689
    %1707 = vmatpush.msra.mxu0 %v1688
    %1708 = vmatpush.msra.mxu0 %v1687
    %1709 = vmatpush.msra.mxu0 %v1686
    %1710 = vmatmul.f32.gmra.mxu0 %v1226
    %v1711 = vpop.f32.mrf.mxu0
    %v1712 = vadd.f32 0.0, %v1711
    %1713 = vmatmul.f32.gmra.mxu0 %v1229
    %v1714 = vpop.f32.mrf.mxu0
    %v1715 = vadd.f32 0.0, %v1714
    %1716 = vmatmul.f32.gmra.mxu0 %v1232
    %v1717 = vpop.f32.mrf.mxu0
    %v1718 = vadd.f32 0.0, %v1717
    %1719 = vmatmul.f32.gmra.mxu0 %v1235
    %v1720 = vpop.f32.mrf.mxu0
    %v1721 = vadd.f32 0.0, %v1720
    %1722 = vdwg.mxu0
    %v1723 = vadd.f32 %v1655, %v1712
    %v1724 = vadd.f32 %v1658, %v1715
    %v1725 = vadd.f32 %v1661, %v1718
    %v1726 = vadd.f32 %v1664, %v1721
    %v1727 = vld [vmem:[#allocation16] sm:$0x1]
    %v1729 = vperm.slane %v1727, 0
    %v1731 = vadd.f32 %v1723, %v1729
    %v1732 = vadd.f32 %v1724, %v1729
    %v1733 = vadd.f32 %v1725, %v1729
    %v1734 = vadd.f32 %v1726, %v1729
    %vm1735 = vcmask 392192
    %1736 = vst.msk [vmem:[#allocation23] sm:$0xff] %vm1735, %v1731
    %1737 = vst.msk [vmem:[#allocation23 + $0x8] sm:$0xff] %vm1735, %v1732
    %1738 = vst.msk [vmem:[#allocation23 + $0x10] sm:$0xff] %vm1735, %v1733
    %1739 = vst.msk [vmem:[#allocation23 + $0x18] sm:$0xff] %vm1735, %v1734
    // Predicated region
    $region142: #{tpu_custom_call.1} parent=1 // pred_check
      _
    $region143: #{tpu_custom_call.1} parent=1 // pred_check_branch
      %1741 = sbr.rel (0) target = $region145
    $region144: #{tpu_custom_call.1} parent=1 // pred_region
      %1743 = vsyncadd [#allocation4], 0
      %s1744 = sshll.u32 [#allocation23], 4
      %s1745 = int_to_ptr.vmem [resolvable:$true] %s1744
      %s1746 = sshll.u32 %s22, 4
      %s1747 = int_to_ptr.hbm [resolvable:$true] %s1746
      %1752 = dma.vmem_to_hbm [thread:$0]  %s1745, 512, %s1747, [#allocation4], 128, 128, 8
    $region145: #{tpu_custom_call.1} parent=1 // pred_fallthru
      _
    // Predicated region
    $region146: #{tpu_custom_call.1} parent=1 // pred_check
      _
    $region147: #{tpu_custom_call.1} parent=1 // pred_check_branch
      %1754 = sbr.rel (0) target = $region149
    $region148: #{tpu_custom_call.1} parent=1 // pred_region
      %1756 = dma.done [#allocation4], 512
    $region149: #{tpu_custom_call.1} parent=1 // pred_fallthru
      _
    %1757 = vsyncpa [#allocation3], 1
    %1758 = vsyncpa [#allocation6], 1
    %1759 = vsyncpa [#allocation9], 1
    %1760 = vsyncpa [#allocation12], 1
    %1761 = vsyncpa [#allocation15], 1
    %1762 = vsyncpa [#allocation18], 1
    %1763 = vsyncpa [#allocation21], 1
    %1764 = vsyncpa [#allocation4], 1

</llo_original>
